<compile_context>
chip_gen: v5e
topology: v5e:2x2
jax: 0.10.0
libtpu: 0.0.40
codegen_flags: <defaults>
</compile_context>

<pallas_src>
import functools
import math

import jax
import jax.numpy as jnp
import numpy as np
from jax import lax
from jax.experimental import pallas as pl
from jax.experimental.pallas import tpu as pltpu

LN_EPS = 1e-5


def _layernorm(h, gamma, beta):
    # One reduction pass: var = E[x^2] - E[x]^2.
    mean = jnp.mean(h, axis=-1, keepdims=True)
    mean_sq = jnp.mean(h * h, axis=-1, keepdims=True)
    var = mean_sq - mean * mean
    return (h - mean) * lax.rsqrt(var + LN_EPS) * gamma + beta


def cross_layer_kernel(
    x_ref, xc_ref,
    wq_ref, bq_ref, wk_ref, bk_ref, wv_ref, bv_ref, wo_ref, bo_ref,
    w1_ref, b1_ref, w2_ref, b2_ref,
    g1_ref, be1_ref, g2_ref, be2_ref,
    out_ref,
    *, batch: int, seq_q: int, num_heads: int,
):
    x = x_ref[...]                       # (B*Sq, D) f32
    xc = xc_ref[...]                     # (B*Sk, D) f32
    D = x.shape[-1]
    seq_k = xc.shape[0] // batch
    dh = D // num_heads
    scale = 1.0 / math.sqrt(dh)

    xb = x.astype(jnp.bfloat16)
    xcb = xc.astype(jnp.bfloat16)

    # --- Q/K/V projections on the flattened rows (bf16 operands, f32 acc) ---
    q = jnp.dot(xb, wq_ref[...], preferred_element_type=jnp.float32) + bq_ref[...]
    k = jnp.dot(xcb, wk_ref[...], preferred_element_type=jnp.float32) + bk_ref[...]
    v = jnp.dot(xcb, wv_ref[...], preferred_element_type=jnp.float32) + bv_ref[...]
    q = q * scale                        # fold 1/sqrt(dh) once into Q

    # Per-head rows of Wo, sliced once (reused for every batch element).
    wo = wo_ref[...]                     # (D, D) f32
    wo_heads = [wo[h * dh:(h + 1) * dh, :] for h in range(num_heads)]

    # --- multi-head cross attention ------------------------------------
    # Per-head context is projected through the matching rows of Wo and
    # accumulated -> no lane-axis concatenate of head outputs.
    attn_rows = []
    for b in range(batch):               # static unroll (small B)
        qb = q[b * seq_q:(b + 1) * seq_q, :]     # (Sq, D) sublane slice
        kb = k[b * seq_k:(b + 1) * seq_k, :]     # (Sk, D)
        vb = v[b * seq_k:(b + 1) * seq_k, :]
        acc = jnp.zeros((seq_q, D), jnp.float32)
        for h in range(num_heads):       # static unroll (small H)
            qh = qb[:, h * dh:(h + 1) * dh]
            kh = kb[:, h * dh:(h + 1) * dh]
            vh = vb[:, h * dh:(h + 1) * dh]
            s = jnp.dot(qh, kh.T, preferred_element_type=jnp.float32)
            s = s - jnp.max(s, axis=-1, keepdims=True)
            p = jnp.exp(s)
            p = p * pl.reciprocal(jnp.sum(p, axis=-1, keepdims=True), approx=True)
            o = jnp.dot(p, vh, preferred_element_type=jnp.float32)     # (Sq, dh)
            acc = acc + jnp.dot(o, wo_heads[h],
                                preferred_element_type=jnp.float32)
        attn_rows.append(acc)
    attn_out = jnp.concatenate(attn_rows, axis=0) + bo_ref[...]        # (B*Sq, D)

    # --- residual + LayerNorm1 (dropout = identity in eval mode) --------
    h1 = _layernorm(x + attn_out, g1_ref[...], be1_ref[...])

    # --- PosFeedForwardNet applied to attn_out (matches module source) --
    # Conv1d(kernel_size=1) == pointwise linear over the embed dim.
    ab = attn_out.astype(jnp.bfloat16)
    f1 = jnp.dot(ab, w1_ref[...], preferred_element_type=jnp.float32) + b1_ref[...]
    f1 = jnp.maximum(f1, 0.0)            # relu
    f2 = jnp.dot(f1.astype(jnp.bfloat16), w2_ref[...],
                 preferred_element_type=jnp.float32) + b2_ref[...]

    # --- residual + LayerNorm2 -------------------------------------------
    out_ref[...] = _layernorm(h1 + f2, g2_ref[...], be2_ref[...]).astype(out_ref.dtype)


def cross_layer(x, x_cross, params, *, num_heads):
    B, Sq, D = x.shape
    Bc, Sk, Dc = x_cross.shape
    assert Bc == B and Dc == D
    assert D % num_heads == 0, "embed_dim must be divisible by num_heads"
    F = params["w1"].shape[1]

    f32, bf16 = jnp.float32, jnp.bfloat16

    # Flatten batch*seq into the matmul M dimension (lane-dim D unchanged).
    x2 = x.reshape(B * Sq, D).astype(f32)
    xc2 = x_cross.reshape(B * Sk, D).astype(f32)

    # bf16 weights for the MXU-heavy matmuls; f32 biases / LN params / Wo
    # (Wo is row-sliced per head inside the kernel; f32 keeps 8-row tiles).
    wq = params["wq"].astype(bf16)
    wk = params["wk"].astype(bf16)
    wv = params["wv"].astype(bf16)
    wo = params["wo"].astype(f32)
    w1 = params["w1"].astype(bf16)
    w2 = params["w2"].astype(bf16)
    bq = params["bq"].astype(f32)
    bk = params["bk"].astype(f32)
    bv = params["bv"].astype(f32)
    bo = params["bo"].astype(f32)
    b1 = params["b1"].astype(f32)
    b2 = params["b2"].astype(f32)
    g1 = params["g1"].astype(f32)
    be1 = params["be1"].astype(f32)
    g2 = params["g2"].astype(f32)
    be2 = params["be2"].astype(f32)

    def full(shape):
        nd = len(shape)
        return pl.BlockSpec(shape, lambda i, _nd=nd: (0,) * _nd)

    kernel = functools.partial(cross_layer_kernel, batch=B, seq_q=Sq,
                               num_heads=num_heads)

    out = pl.pallas_call(
        kernel,
        out_shape=jax.ShapeDtypeStruct((B * Sq, D), jnp.float32),
        grid_spec=pltpu.PrefetchScalarGridSpec(
            num_scalar_prefetch=0,
            # Whole (small) batch in a single grid step: amortizes the
            # per-step pipeline overhead and keeps weights VMEM-resident.
            grid=(1,),
            in_specs=[
                full((B * Sq, D)), full((B * Sk, D)),    # x (flat), x_cross (flat)
                full((D, D)), full((1, D)),              # wq, bq
                full((D, D)), full((1, D)),              # wk, bk
                full((D, D)), full((1, D)),              # wv, bv
                full((D, D)), full((1, D)),              # wo, bo
                full((D, F)), full((1, F)),              # w1, b1  (conv1 k=1)
                full((F, D)), full((1, D)),              # w2, b2  (conv2 k=1)
                full((1, D)), full((1, D)),              # ln1 gamma/beta
                full((1, D)), full((1, D)),              # ln2 gamma/beta
            ],
            out_specs=full((B * Sq, D)),
        ),
        compiler_params=pltpu.CompilerParams(
            dimension_semantics=("arbitrary",),
            vmem_limit_bytes=64 * 1024 * 1024,
        ),
    )(
        x2, xc2,
        wq, bq, wk, bk, wv, bv, wo, bo,
        w1, b1, w2, b2,
        g1, be1, g2, be2,
    )
    return out.reshape(B, Sq, D)


def cross_layer_ref(x, x_cross, p, *, num_heads):
    """Pure-JAX f32 reference mirroring the PyTorch forward (eval mode)."""
    B, Sq, D = x.shape
    dh = D // num_heads
    q = x @ p["wq"] + p["bq"]
    k = x_cross @ p["wk"] + p["bk"]
    v = x_cross @ p["wv"] + p["bv"]

    def split(t):
        return t.reshape(B, -1, num_heads, dh).transpose(0, 2, 1, 3)

    qh, kh, vh = split(q), split(k), split(v)
    s = jnp.einsum("bhqd,bhkd->bhqk", qh, kh) / math.sqrt(dh)
    a = jax.nn.softmax(s, axis=-1)
    ctx = jnp.einsum("bhqk,bhkd->bhqd", a, vh).transpose(0, 2, 1, 3).reshape(B, Sq, D)
    attn_out = ctx @ p["wo"] + p["bo"]

    def ln(h, g, b):
        m = h.mean(-1, keepdims=True)
        var = ((h - m) ** 2).mean(-1, keepdims=True)
        return (h - m) / jnp.sqrt(var + LN_EPS) * g + b

    h1 = ln(x + attn_out, p["g1"], p["be1"])
    ff = jnp.maximum(attn_out @ p["w1"] + p["b1"], 0.0) @ p["w2"] + p["b2"]
    return ln(h1 + ff, p["g2"], p["be2"])


if __name__ == "__main__":
    B, Sq, Sk = 2, 8, 8
    D, F, H = 32, 64, 4     # embed_dim, forward_dim, num_heads

    key = jax.random.PRNGKey(0)
    ks = jax.random.split(key, 12)
    scale = 0.1
    params = {
        "wq": scale * jax.random.normal(ks[0], (D, D), jnp.float32),
        "bq": scale * jax.random.normal(ks[1], (1, D), jnp.float32),
        "wk": scale * jax.random.normal(ks[2], (D, D), jnp.float32),
        "bk": scale * jax.random.normal(ks[3], (1, D), jnp.float32),
        "wv": scale * jax.random.normal(ks[4], (D, D), jnp.float32),
        "bv": scale * jax.random.normal(ks[5], (1, D), jnp.float32),
        "wo": scale * jax.random.normal(ks[6], (D, D), jnp.float32),
        "bo": scale * jax.random.normal(ks[7], (1, D), jnp.float32),
        "w1": scale * jax.random.normal(ks[8], (D, F), jnp.float32),   # conv1 (k=1)
        "b1": scale * jax.random.normal(ks[9], (1, F), jnp.float32),
        "w2": scale * jax.random.normal(ks[10], (F, D), jnp.float32),  # conv2 (k=1)
        "b2": scale * jax.random.normal(ks[11], (1, D), jnp.float32),
        "g1": jnp.ones((1, D), jnp.float32),
        "be1": jnp.zeros((1, D), jnp.float32),
        "g2": jnp.ones((1, D), jnp.float32),
        "be2": jnp.zeros((1, D), jnp.float32),
    }

    kx, kxc = jax.random.split(jax.random.PRNGKey(1))
    x = jax.random.normal(kx, (B, Sq, D), jnp.float32)
    x_cross = jax.random.normal(kxc, (B, Sk, D), jnp.float32)

    out = cross_layer(x, x_cross, params, num_heads=H)
    out = jax.block_until_ready(out)

    ref = cross_layer_ref(x, x_cross, params, num_heads=H)
    # bf16 matmul operands (f32 accumulation) -> compare with mixed-precision
    # tolerance against the pure-f32 reference.
    np.testing.assert_allclose(np.asarray(out), np.asarray(ref),
                               rtol=2e-2, atol=2e-2)
    print("KERNEL_OK")
</pallas_src>

<mosaic_0001>
module attributes {stable_mosaic.version = 11 : i64} {
  func.func @cross_layer_kernel(%arg0: i32, %arg1: memref<16x32xf32, #tpu.memory_space<vmem>>, %arg2: memref<16x32xf32, #tpu.memory_space<vmem>>, %arg3: memref<32x32xbf16, #tpu.memory_space<vmem>>, %arg4: memref<1x32xf32, #tpu.memory_space<vmem>>, %arg5: memref<32x32xbf16, #tpu.memory_space<vmem>>, %arg6: memref<1x32xf32, #tpu.memory_space<vmem>>, %arg7: memref<32x32xbf16, #tpu.memory_space<vmem>>, %arg8: memref<1x32xf32, #tpu.memory_space<vmem>>, %arg9: memref<32x32xf32, #tpu.memory_space<vmem>>, %arg10: memref<1x32xf32, #tpu.memory_space<vmem>>, %arg11: memref<32x64xbf16, #tpu.memory_space<vmem>>, %arg12: memref<1x64xf32, #tpu.memory_space<vmem>>, %arg13: memref<64x32xbf16, #tpu.memory_space<vmem>>, %arg14: memref<1x32xf32, #tpu.memory_space<vmem>>, %arg15: memref<1x32xf32, #tpu.memory_space<vmem>>, %arg16: memref<1x32xf32, #tpu.memory_space<vmem>>, %arg17: memref<1x32xf32, #tpu.memory_space<vmem>>, %arg18: memref<1x32xf32, #tpu.memory_space<vmem>>, %arg19: memref<16x32xf32, #tpu.memory_space<vmem>>) attributes {dimension_semantics = [#tpu.dimension_semantics<arbitrary>], iteration_bounds = array<i64: 1>, scalar_prefetch = 0 : i64, scratch_operands = 0 : i64, tpu.core_type = #tpu.core_type<tc>, window_params = [{pipeline_mode = #tpu.pipeline_mode<synchronous>, transform_indices = @transform_0, window_bounds = array<i64: 16, 32>}, {pipeline_mode = #tpu.pipeline_mode<synchronous>, transform_indices = @transform_1, window_bounds = array<i64: 16, 32>}, {pipeline_mode = #tpu.pipeline_mode<synchronous>, transform_indices = @transform_2, window_bounds = array<i64: 32, 32>}, {pipeline_mode = #tpu.pipeline_mode<synchronous>, transform_indices = @transform_3, window_bounds = array<i64: 1, 32>}, {pipeline_mode = #tpu.pipeline_mode<synchronous>, transform_indices = @transform_4, window_bounds = array<i64: 32, 32>}, {pipeline_mode = #tpu.pipeline_mode<synchronous>, transform_indices = @transform_5, window_bounds = array<i64: 1, 32>}, {pipeline_mode = #tpu.pipeline_mode<synchronous>, transform_indices = @transform_6, window_bounds = array<i64: 32, 32>}, {pipeline_mode = #tpu.pipeline_mode<synchronous>, transform_indices = @transform_7, window_bounds = array<i64: 1, 32>}, {pipeline_mode = #tpu.pipeline_mode<synchronous>, transform_indices = @transform_8, window_bounds = array<i64: 32, 32>}, {pipeline_mode = #tpu.pipeline_mode<synchronous>, transform_indices = @transform_9, window_bounds = array<i64: 1, 32>}, {pipeline_mode = #tpu.pipeline_mode<synchronous>, transform_indices = @transform_10, window_bounds = array<i64: 32, 64>}, {pipeline_mode = #tpu.pipeline_mode<synchronous>, transform_indices = @transform_11, window_bounds = array<i64: 1, 64>}, {pipeline_mode = #tpu.pipeline_mode<synchronous>, transform_indices = @transform_12, window_bounds = array<i64: 64, 32>}, {pipeline_mode = #tpu.pipeline_mode<synchronous>, transform_indices = @transform_13, window_bounds = array<i64: 1, 32>}, {pipeline_mode = #tpu.pipeline_mode<synchronous>, transform_indices = @transform_14, window_bounds = array<i64: 1, 32>}, {pipeline_mode = #tpu.pipeline_mode<synchronous>, transform_indices = @transform_15, window_bounds = array<i64: 1, 32>}, {pipeline_mode = #tpu.pipeline_mode<synchronous>, transform_indices = @transform_16, window_bounds = array<i64: 1, 32>}, {pipeline_mode = #tpu.pipeline_mode<synchronous>, transform_indices = @transform_17, window_bounds = array<i64: 1, 32>}, {pipeline_mode = #tpu.pipeline_mode<synchronous>, transform_indices = @transform_18, window_bounds = array<i64: 16, 32>}]} {
    %c0 = arith.constant 0 : index
    %c0_0 = arith.constant 0 : index
    %0 = vector.load %arg1[%c0, %c0_0] : memref<16x32xf32, #tpu.memory_space<vmem>>, vector<16x32xf32>
    %c0_1 = arith.constant 0 : index
    %c0_2 = arith.constant 0 : index
    %1 = vector.load %arg2[%c0_1, %c0_2] : memref<16x32xf32, #tpu.memory_space<vmem>>, vector<16x32xf32>
    %2 = arith.truncf %0 : vector<16x32xf32> to vector<16x32xbf16>
    %3 = arith.truncf %1 : vector<16x32xf32> to vector<16x32xbf16>
    %c0_3 = arith.constant 0 : index
    %c0_4 = arith.constant 0 : index
    %4 = vector.load %arg3[%c0_3, %c0_4] : memref<32x32xbf16, #tpu.memory_space<vmem>>, vector<32x32xbf16>
    %cst = arith.constant dense<0.000000e+00> : vector<16x32xf32>
    %5 = tpu.matmul %2, %4, %cst {dimension_numbers = #tpu.dot_dimension_numbers<[1], [0], [0], [1], [0, 0, 1, 1], [], []>} : vector<16x32xbf16>, vector<32x32xbf16>, vector<16x32xf32> -> vector<16x32xf32>
    %c0_5 = arith.constant 0 : index
    %c0_6 = arith.constant 0 : index
    %6 = vector.load %arg4[%c0_5, %c0_6] : memref<1x32xf32, #tpu.memory_space<vmem>>, vector<1x32xf32>
    %7 = vector.broadcast %6 : vector<1x32xf32> to vector<16x32xf32>
    %8 = arith.addf %5, %7 : vector<16x32xf32>
    %c0_7 = arith.constant 0 : index
    %c0_8 = arith.constant 0 : index
    %9 = vector.load %arg5[%c0_7, %c0_8] : memref<32x32xbf16, #tpu.memory_space<vmem>>, vector<32x32xbf16>
    %cst_9 = arith.constant dense<0.000000e+00> : vector<16x32xf32>
    %10 = tpu.matmul %3, %9, %cst_9 {dimension_numbers = #tpu.dot_dimension_numbers<[1], [0], [0], [1], [0, 0, 1, 1], [], []>} : vector<16x32xbf16>, vector<32x32xbf16>, vector<16x32xf32> -> vector<16x32xf32>
    %c0_10 = arith.constant 0 : index
    %c0_11 = arith.constant 0 : index
    %11 = vector.load %arg6[%c0_10, %c0_11] : memref<1x32xf32, #tpu.memory_space<vmem>>, vector<1x32xf32>
    %12 = vector.broadcast %11 : vector<1x32xf32> to vector<16x32xf32>
    %13 = arith.addf %10, %12 : vector<16x32xf32>
    %c0_12 = arith.constant 0 : index
    %c0_13 = arith.constant 0 : index
    %14 = vector.load %arg7[%c0_12, %c0_13] : memref<32x32xbf16, #tpu.memory_space<vmem>>, vector<32x32xbf16>
    %cst_14 = arith.constant dense<0.000000e+00> : vector<16x32xf32>
    %15 = tpu.matmul %3, %14, %cst_14 {dimension_numbers = #tpu.dot_dimension_numbers<[1], [0], [0], [1], [0, 0, 1, 1], [], []>} : vector<16x32xbf16>, vector<32x32xbf16>, vector<16x32xf32> -> vector<16x32xf32>
    %c0_15 = arith.constant 0 : index
    %c0_16 = arith.constant 0 : index
    %16 = vector.load %arg8[%c0_15, %c0_16] : memref<1x32xf32, #tpu.memory_space<vmem>>, vector<1x32xf32>
    %17 = vector.broadcast %16 : vector<1x32xf32> to vector<16x32xf32>
    %18 = arith.addf %15, %17 : vector<16x32xf32>
    %cst_17 = arith.constant 0.353553385 : f32
    %19 = vector.broadcast %cst_17 : f32 to vector<16x32xf32>
    %20 = arith.mulf %8, %19 : vector<16x32xf32>
    %c0_18 = arith.constant 0 : index
    %c0_19 = arith.constant 0 : index
    %21 = vector.load %arg9[%c0_18, %c0_19] : memref<32x32xf32, #tpu.memory_space<vmem>>, vector<32x32xf32>
    %22 = vector.extract_strided_slice %21 {offsets = [0, 0], sizes = [8, 32], strides = [1, 1]} : vector<32x32xf32> to vector<8x32xf32>
    %23 = vector.extract_strided_slice %21 {offsets = [8, 0], sizes = [8, 32], strides = [1, 1]} : vector<32x32xf32> to vector<8x32xf32>
    %24 = vector.extract_strided_slice %21 {offsets = [16, 0], sizes = [8, 32], strides = [1, 1]} : vector<32x32xf32> to vector<8x32xf32>
    %25 = vector.extract_strided_slice %21 {offsets = [24, 0], sizes = [8, 32], strides = [1, 1]} : vector<32x32xf32> to vector<8x32xf32>
    %26 = vector.extract_strided_slice %20 {offsets = [0, 0], sizes = [8, 32], strides = [1, 1]} : vector<16x32xf32> to vector<8x32xf32>
    %27 = vector.extract_strided_slice %13 {offsets = [0, 0], sizes = [8, 32], strides = [1, 1]} : vector<16x32xf32> to vector<8x32xf32>
    %28 = vector.extract_strided_slice %18 {offsets = [0, 0], sizes = [8, 32], strides = [1, 1]} : vector<16x32xf32> to vector<8x32xf32>
    %cst_20 = arith.constant 0.000000e+00 : f32
    %29 = vector.broadcast %cst_20 : f32 to vector<8x32xf32>
    %30 = vector.extract_strided_slice %26 {offsets = [0, 0], sizes = [8, 8], strides = [1, 1]} : vector<8x32xf32> to vector<8x8xf32>
    %31 = vector.extract_strided_slice %27 {offsets = [0, 0], sizes = [8, 8], strides = [1, 1]} : vector<8x32xf32> to vector<8x8xf32>
    %32 = vector.extract_strided_slice %28 {offsets = [0, 0], sizes = [8, 8], strides = [1, 1]} : vector<8x32xf32> to vector<8x8xf32>
    %33 = tpu.transpose %31, [1, 0] : vector<8x8xf32> -> vector<8x8xf32>
    %cst_21 = arith.constant dense<0.000000e+00> : vector<8x8xf32>
    %34 = tpu.matmul %30, %33, %cst_21 {dimension_numbers = #tpu.dot_dimension_numbers<[1], [0], [0], [1], [0, 0, 1, 1], [], []>} : vector<8x8xf32>, vector<8x8xf32>, vector<8x8xf32> -> vector<8x8xf32>
    %cst_22 = arith.constant dense<0xFF800000> : vector<8xf32>
    %35 = vector.multi_reduction <maximumf>, %34, %cst_22 [1] : vector<8x8xf32> to vector<8xf32>
    %36 = vector.shape_cast %35 : vector<8xf32> to vector<8x1xf32>
    %37 = vector.broadcast %36 : vector<8x1xf32> to vector<8x8xf32>
    %38 = arith.subf %34, %37 : vector<8x8xf32>
    %39 = math.exp %38 : vector<8x8xf32>
    %cst_23 = arith.constant dense<0.000000e+00> : vector<8xf32>
    %40 = vector.multi_reduction <add>, %39, %cst_23 [1] : vector<8x8xf32> to vector<8xf32>
    %41 = vector.shape_cast %40 : vector<8xf32> to vector<8x1xf32>
    %42 = tpu.reciprocal %41 {approx = true} : vector<8x1xf32> -> vector<8x1xf32>
    %43 = vector.broadcast %42 : vector<8x1xf32> to vector<8x8xf32>
    %44 = arith.mulf %39, %43 : vector<8x8xf32>
    %cst_24 = arith.constant dense<0.000000e+00> : vector<8x8xf32>
    %45 = tpu.matmul %44, %32, %cst_24 {dimension_numbers = #tpu.dot_dimension_numbers<[1], [0], [0], [1], [0, 0, 1, 1], [], []>} : vector<8x8xf32>, vector<8x8xf32>, vector<8x8xf32> -> vector<8x8xf32>
    %cst_25 = arith.constant dense<0.000000e+00> : vector<8x32xf32>
    %46 = tpu.matmul %45, %22, %cst_25 {dimension_numbers = #tpu.dot_dimension_numbers<[1], [0], [0], [1], [0, 0, 1, 1], [], []>} : vector<8x8xf32>, vector<8x32xf32>, vector<8x32xf32> -> vector<8x32xf32>
    %47 = arith.addf %29, %46 : vector<8x32xf32>
    %48 = vector.extract_strided_slice %26 {offsets = [0, 8], sizes = [8, 8], strides = [1, 1]} : vector<8x32xf32> to vector<8x8xf32>
    %49 = vector.extract_strided_slice %27 {offsets = [0, 8], sizes = [8, 8], strides = [1, 1]} : vector<8x32xf32> to vector<8x8xf32>
    %50 = vector.extract_strided_slice %28 {offsets = [0, 8], sizes = [8, 8], strides = [1, 1]} : vector<8x32xf32> to vector<8x8xf32>
    %51 = tpu.transpose %49, [1, 0] : vector<8x8xf32> -> vector<8x8xf32>
    %cst_26 = arith.constant dense<0.000000e+00> : vector<8x8xf32>
    %52 = tpu.matmul %48, %51, %cst_26 {dimension_numbers = #tpu.dot_dimension_numbers<[1], [0], [0], [1], [0, 0, 1, 1], [], []>} : vector<8x8xf32>, vector<8x8xf32>, vector<8x8xf32> -> vector<8x8xf32>
    %cst_27 = arith.constant dense<0xFF800000> : vector<8xf32>
    %53 = vector.multi_reduction <maximumf>, %52, %cst_27 [1] : vector<8x8xf32> to vector<8xf32>
    %54 = vector.shape_cast %53 : vector<8xf32> to vector<8x1xf32>
    %55 = vector.broadcast %54 : vector<8x1xf32> to vector<8x8xf32>
    %56 = arith.subf %52, %55 : vector<8x8xf32>
    %57 = math.exp %56 : vector<8x8xf32>
    %cst_28 = arith.constant dense<0.000000e+00> : vector<8xf32>
    %58 = vector.multi_reduction <add>, %57, %cst_28 [1] : vector<8x8xf32> to vector<8xf32>
    %59 = vector.shape_cast %58 : vector<8xf32> to vector<8x1xf32>
    %60 = tpu.reciprocal %59 {approx = true} : vector<8x1xf32> -> vector<8x1xf32>
    %61 = vector.broadcast %60 : vector<8x1xf32> to vector<8x8xf32>
    %62 = arith.mulf %57, %61 : vector<8x8xf32>
    %cst_29 = arith.constant dense<0.000000e+00> : vector<8x8xf32>
    %63 = tpu.matmul %62, %50, %cst_29 {dimension_numbers = #tpu.dot_dimension_numbers<[1], [0], [0], [1], [0, 0, 1, 1], [], []>} : vector<8x8xf32>, vector<8x8xf32>, vector<8x8xf32> -> vector<8x8xf32>
    %cst_30 = arith.constant dense<0.000000e+00> : vector<8x32xf32>
    %64 = tpu.matmul %63, %23, %cst_30 {dimension_numbers = #tpu.dot_dimension_numbers<[1], [0], [0], [1], [0, 0, 1, 1], [], []>} : vector<8x8xf32>, vector<8x32xf32>, vector<8x32xf32> -> vector<8x32xf32>
    %65 = arith.addf %47, %64 : vector<8x32xf32>
    %66 = vector.extract_strided_slice %26 {offsets = [0, 16], sizes = [8, 8], strides = [1, 1]} : vector<8x32xf32> to vector<8x8xf32>
    %67 = vector.extract_strided_slice %27 {offsets = [0, 16], sizes = [8, 8], strides = [1, 1]} : vector<8x32xf32> to vector<8x8xf32>
    %68 = vector.extract_strided_slice %28 {offsets = [0, 16], sizes = [8, 8], strides = [1, 1]} : vector<8x32xf32> to vector<8x8xf32>
    %69 = tpu.transpose %67, [1, 0] : vector<8x8xf32> -> vector<8x8xf32>
    %cst_31 = arith.constant dense<0.000000e+00> : vector<8x8xf32>
    %70 = tpu.matmul %66, %69, %cst_31 {dimension_numbers = #tpu.dot_dimension_numbers<[1], [0], [0], [1], [0, 0, 1, 1], [], []>} : vector<8x8xf32>, vector<8x8xf32>, vector<8x8xf32> -> vector<8x8xf32>
    %cst_32 = arith.constant dense<0xFF800000> : vector<8xf32>
    %71 = vector.multi_reduction <maximumf>, %70, %cst_32 [1] : vector<8x8xf32> to vector<8xf32>
    %72 = vector.shape_cast %71 : vector<8xf32> to vector<8x1xf32>
    %73 = vector.broadcast %72 : vector<8x1xf32> to vector<8x8xf32>
    %74 = arith.subf %70, %73 : vector<8x8xf32>
    %75 = math.exp %74 : vector<8x8xf32>
    %cst_33 = arith.constant dense<0.000000e+00> : vector<8xf32>
    %76 = vector.multi_reduction <add>, %75, %cst_33 [1] : vector<8x8xf32> to vector<8xf32>
    %77 = vector.shape_cast %76 : vector<8xf32> to vector<8x1xf32>
    %78 = tpu.reciprocal %77 {approx = true} : vector<8x1xf32> -> vector<8x1xf32>
    %79 = vector.broadcast %78 : vector<8x1xf32> to vector<8x8xf32>
    %80 = arith.mulf %75, %79 : vector<8x8xf32>
    %cst_34 = arith.constant dense<0.000000e+00> : vector<8x8xf32>
    %81 = tpu.matmul %80, %68, %cst_34 {dimension_numbers = #tpu.dot_dimension_numbers<[1], [0], [0], [1], [0, 0, 1, 1], [], []>} : vector<8x8xf32>, vector<8x8xf32>, vector<8x8xf32> -> vector<8x8xf32>
    %cst_35 = arith.constant dense<0.000000e+00> : vector<8x32xf32>
    %82 = tpu.matmul %81, %24, %cst_35 {dimension_numbers = #tpu.dot_dimension_numbers<[1], [0], [0], [1], [0, 0, 1, 1], [], []>} : vector<8x8xf32>, vector<8x32xf32>, vector<8x32xf32> -> vector<8x32xf32>
    %83 = arith.addf %65, %82 : vector<8x32xf32>
    %84 = vector.extract_strided_slice %26 {offsets = [0, 24], sizes = [8, 8], strides = [1, 1]} : vector<8x32xf32> to vector<8x8xf32>
    %85 = vector.extract_strided_slice %27 {offsets = [0, 24], sizes = [8, 8], strides = [1, 1]} : vector<8x32xf32> to vector<8x8xf32>
    %86 = vector.extract_strided_slice %28 {offsets = [0, 24], sizes = [8, 8], strides = [1, 1]} : vector<8x32xf32> to vector<8x8xf32>
    %87 = tpu.transpose %85, [1, 0] : vector<8x8xf32> -> vector<8x8xf32>
    %cst_36 = arith.constant dense<0.000000e+00> : vector<8x8xf32>
    %88 = tpu.matmul %84, %87, %cst_36 {dimension_numbers = #tpu.dot_dimension_numbers<[1], [0], [0], [1], [0, 0, 1, 1], [], []>} : vector<8x8xf32>, vector<8x8xf32>, vector<8x8xf32> -> vector<8x8xf32>
    %cst_37 = arith.constant dense<0xFF800000> : vector<8xf32>
    %89 = vector.multi_reduction <maximumf>, %88, %cst_37 [1] : vector<8x8xf32> to vector<8xf32>
    %90 = vector.shape_cast %89 : vector<8xf32> to vector<8x1xf32>
    %91 = vector.broadcast %90 : vector<8x1xf32> to vector<8x8xf32>
    %92 = arith.subf %88, %91 : vector<8x8xf32>
    %93 = math.exp %92 : vector<8x8xf32>
    %cst_38 = arith.constant dense<0.000000e+00> : vector<8xf32>
    %94 = vector.multi_reduction <add>, %93, %cst_38 [1] : vector<8x8xf32> to vector<8xf32>
    %95 = vector.shape_cast %94 : vector<8xf32> to vector<8x1xf32>
    %96 = tpu.reciprocal %95 {approx = true} : vector<8x1xf32> -> vector<8x1xf32>
    %97 = vector.broadcast %96 : vector<8x1xf32> to vector<8x8xf32>
    %98 = arith.mulf %93, %97 : vector<8x8xf32>
    %cst_39 = arith.constant dense<0.000000e+00> : vector<8x8xf32>
    %99 = tpu.matmul %98, %86, %cst_39 {dimension_numbers = #tpu.dot_dimension_numbers<[1], [0], [0], [1], [0, 0, 1, 1], [], []>} : vector<8x8xf32>, vector<8x8xf32>, vector<8x8xf32> -> vector<8x8xf32>
    %cst_40 = arith.constant dense<0.000000e+00> : vector<8x32xf32>
    %100 = tpu.matmul %99, %25, %cst_40 {dimension_numbers = #tpu.dot_dimension_numbers<[1], [0], [0], [1], [0, 0, 1, 1], [], []>} : vector<8x8xf32>, vector<8x32xf32>, vector<8x32xf32> -> vector<8x32xf32>
    %101 = arith.addf %83, %100 : vector<8x32xf32>
    %102 = vector.extract_strided_slice %20 {offsets = [8, 0], sizes = [8, 32], strides = [1, 1]} : vector<16x32xf32> to vector<8x32xf32>
    %103 = vector.extract_strided_slice %13 {offsets = [8, 0], sizes = [8, 32], strides = [1, 1]} : vector<16x32xf32> to vector<8x32xf32>
    %104 = vector.extract_strided_slice %18 {offsets = [8, 0], sizes = [8, 32], strides = [1, 1]} : vector<16x32xf32> to vector<8x32xf32>
    %cst_41 = arith.constant 0.000000e+00 : f32
    %105 = vector.broadcast %cst_41 : f32 to vector<8x32xf32>
    %106 = vector.extract_strided_slice %102 {offsets = [0, 0], sizes = [8, 8], strides = [1, 1]} : vector<8x32xf32> to vector<8x8xf32>
    %107 = vector.extract_strided_slice %103 {offsets = [0, 0], sizes = [8, 8], strides = [1, 1]} : vector<8x32xf32> to vector<8x8xf32>
    %108 = vector.extract_strided_slice %104 {offsets = [0, 0], sizes = [8, 8], strides = [1, 1]} : vector<8x32xf32> to vector<8x8xf32>
    %109 = tpu.transpose %107, [1, 0] : vector<8x8xf32> -> vector<8x8xf32>
    %cst_42 = arith.constant dense<0.000000e+00> : vector<8x8xf32>
    %110 = tpu.matmul %106, %109, %cst_42 {dimension_numbers = #tpu.dot_dimension_numbers<[1], [0], [0], [1], [0, 0, 1, 1], [], []>} : vector<8x8xf32>, vector<8x8xf32>, vector<8x8xf32> -> vector<8x8xf32>
    %cst_43 = arith.constant dense<0xFF800000> : vector<8xf32>
    %111 = vector.multi_reduction <maximumf>, %110, %cst_43 [1] : vector<8x8xf32> to vector<8xf32>
    %112 = vector.shape_cast %111 : vector<8xf32> to vector<8x1xf32>
    %113 = vector.broadcast %112 : vector<8x1xf32> to vector<8x8xf32>
    %114 = arith.subf %110, %113 : vector<8x8xf32>
    %115 = math.exp %114 : vector<8x8xf32>
    %cst_44 = arith.constant dense<0.000000e+00> : vector<8xf32>
    %116 = vector.multi_reduction <add>, %115, %cst_44 [1] : vector<8x8xf32> to vector<8xf32>
    %117 = vector.shape_cast %116 : vector<8xf32> to vector<8x1xf32>
    %118 = tpu.reciprocal %117 {approx = true} : vector<8x1xf32> -> vector<8x1xf32>
    %119 = vector.broadcast %118 : vector<8x1xf32> to vector<8x8xf32>
    %120 = arith.mulf %115, %119 : vector<8x8xf32>
    %cst_45 = arith.constant dense<0.000000e+00> : vector<8x8xf32>
    %121 = tpu.matmul %120, %108, %cst_45 {dimension_numbers = #tpu.dot_dimension_numbers<[1], [0], [0], [1], [0, 0, 1, 1], [], []>} : vector<8x8xf32>, vector<8x8xf32>, vector<8x8xf32> -> vector<8x8xf32>
    %cst_46 = arith.constant dense<0.000000e+00> : vector<8x32xf32>
    %122 = tpu.matmul %121, %22, %cst_46 {dimension_numbers = #tpu.dot_dimension_numbers<[1], [0], [0], [1], [0, 0, 1, 1], [], []>} : vector<8x8xf32>, vector<8x32xf32>, vector<8x32xf32> -> vector<8x32xf32>
    %123 = arith.addf %105, %122 : vector<8x32xf32>
    %124 = vector.extract_strided_slice %102 {offsets = [0, 8], sizes = [8, 8], strides = [1, 1]} : vector<8x32xf32> to vector<8x8xf32>
    %125 = vector.extract_strided_slice %103 {offsets = [0, 8], sizes = [8, 8], strides = [1, 1]} : vector<8x32xf32> to vector<8x8xf32>
    %126 = vector.extract_strided_slice %104 {offsets = [0, 8], sizes = [8, 8], strides = [1, 1]} : vector<8x32xf32> to vector<8x8xf32>
    %127 = tpu.transpose %125, [1, 0] : vector<8x8xf32> -> vector<8x8xf32>
    %cst_47 = arith.constant dense<0.000000e+00> : vector<8x8xf32>
    %128 = tpu.matmul %124, %127, %cst_47 {dimension_numbers = #tpu.dot_dimension_numbers<[1], [0], [0], [1], [0, 0, 1, 1], [], []>} : vector<8x8xf32>, vector<8x8xf32>, vector<8x8xf32> -> vector<8x8xf32>
    %cst_48 = arith.constant dense<0xFF800000> : vector<8xf32>
    %129 = vector.multi_reduction <maximumf>, %128, %cst_48 [1] : vector<8x8xf32> to vector<8xf32>
    %130 = vector.shape_cast %129 : vector<8xf32> to vector<8x1xf32>
    %131 = vector.broadcast %130 : vector<8x1xf32> to vector<8x8xf32>
    %132 = arith.subf %128, %131 : vector<8x8xf32>
    %133 = math.exp %132 : vector<8x8xf32>
    %cst_49 = arith.constant dense<0.000000e+00> : vector<8xf32>
    %134 = vector.multi_reduction <add>, %133, %cst_49 [1] : vector<8x8xf32> to vector<8xf32>
    %135 = vector.shape_cast %134 : vector<8xf32> to vector<8x1xf32>
    %136 = tpu.reciprocal %135 {approx = true} : vector<8x1xf32> -> vector<8x1xf32>
    %137 = vector.broadcast %136 : vector<8x1xf32> to vector<8x8xf32>
    %138 = arith.mulf %133, %137 : vector<8x8xf32>
    %cst_50 = arith.constant dense<0.000000e+00> : vector<8x8xf32>
    %139 = tpu.matmul %138, %126, %cst_50 {dimension_numbers = #tpu.dot_dimension_numbers<[1], [0], [0], [1], [0, 0, 1, 1], [], []>} : vector<8x8xf32>, vector<8x8xf32>, vector<8x8xf32> -> vector<8x8xf32>
    %cst_51 = arith.constant dense<0.000000e+00> : vector<8x32xf32>
    %140 = tpu.matmul %139, %23, %cst_51 {dimension_numbers = #tpu.dot_dimension_numbers<[1], [0], [0], [1], [0, 0, 1, 1], [], []>} : vector<8x8xf32>, vector<8x32xf32>, vector<8x32xf32> -> vector<8x32xf32>
    %141 = arith.addf %123, %140 : vector<8x32xf32>
    %142 = vector.extract_strided_slice %102 {offsets = [0, 16], sizes = [8, 8], strides = [1, 1]} : vector<8x32xf32> to vector<8x8xf32>
    %143 = vector.extract_strided_slice %103 {offsets = [0, 16], sizes = [8, 8], strides = [1, 1]} : vector<8x32xf32> to vector<8x8xf32>
    %144 = vector.extract_strided_slice %104 {offsets = [0, 16], sizes = [8, 8], strides = [1, 1]} : vector<8x32xf32> to vector<8x8xf32>
    %145 = tpu.transpose %143, [1, 0] : vector<8x8xf32> -> vector<8x8xf32>
    %cst_52 = arith.constant dense<0.000000e+00> : vector<8x8xf32>
    %146 = tpu.matmul %142, %145, %cst_52 {dimension_numbers = #tpu.dot_dimension_numbers<[1], [0], [0], [1], [0, 0, 1, 1], [], []>} : vector<8x8xf32>, vector<8x8xf32>, vector<8x8xf32> -> vector<8x8xf32>
    %cst_53 = arith.constant dense<0xFF800000> : vector<8xf32>
    %147 = vector.multi_reduction <maximumf>, %146, %cst_53 [1] : vector<8x8xf32> to vector<8xf32>
    %148 = vector.shape_cast %147 : vector<8xf32> to vector<8x1xf32>
    %149 = vector.broadcast %148 : vector<8x1xf32> to vector<8x8xf32>
    %150 = arith.subf %146, %149 : vector<8x8xf32>
    %151 = math.exp %150 : vector<8x8xf32>
    %cst_54 = arith.constant dense<0.000000e+00> : vector<8xf32>
    %152 = vector.multi_reduction <add>, %151, %cst_54 [1] : vector<8x8xf32> to vector<8xf32>
    %153 = vector.shape_cast %152 : vector<8xf32> to vector<8x1xf32>
    %154 = tpu.reciprocal %153 {approx = true} : vector<8x1xf32> -> vector<8x1xf32>
    %155 = vector.broadcast %154 : vector<8x1xf32> to vector<8x8xf32>
    %156 = arith.mulf %151, %155 : vector<8x8xf32>
    %cst_55 = arith.constant dense<0.000000e+00> : vector<8x8xf32>
    %157 = tpu.matmul %156, %144, %cst_55 {dimension_numbers = #tpu.dot_dimension_numbers<[1], [0], [0], [1], [0, 0, 1, 1], [], []>} : vector<8x8xf32>, vector<8x8xf32>, vector<8x8xf32> -> vector<8x8xf32>
    %cst_56 = arith.constant dense<0.000000e+00> : vector<8x32xf32>
    %158 = tpu.matmul %157, %24, %cst_56 {dimension_numbers = #tpu.dot_dimension_numbers<[1], [0], [0], [1], [0, 0, 1, 1], [], []>} : vector<8x8xf32>, vector<8x32xf32>, vector<8x32xf32> -> vector<8x32xf32>
    %159 = arith.addf %141, %158 : vector<8x32xf32>
    %160 = vector.extract_strided_slice %102 {offsets = [0, 24], sizes = [8, 8], strides = [1, 1]} : vector<8x32xf32> to vector<8x8xf32>
    %161 = vector.extract_strided_slice %103 {offsets = [0, 24], sizes = [8, 8], strides = [1, 1]} : vector<8x32xf32> to vector<8x8xf32>
    %162 = vector.extract_strided_slice %104 {offsets = [0, 24], sizes = [8, 8], strides = [1, 1]} : vector<8x32xf32> to vector<8x8xf32>
    %163 = tpu.transpose %161, [1, 0] : vector<8x8xf32> -> vector<8x8xf32>
    %cst_57 = arith.constant dense<0.000000e+00> : vector<8x8xf32>
    %164 = tpu.matmul %160, %163, %cst_57 {dimension_numbers = #tpu.dot_dimension_numbers<[1], [0], [0], [1], [0, 0, 1, 1], [], []>} : vector<8x8xf32>, vector<8x8xf32>, vector<8x8xf32> -> vector<8x8xf32>
    %cst_58 = arith.constant dense<0xFF800000> : vector<8xf32>
    %165 = vector.multi_reduction <maximumf>, %164, %cst_58 [1] : vector<8x8xf32> to vector<8xf32>
    %166 = vector.shape_cast %165 : vector<8xf32> to vector<8x1xf32>
    %167 = vector.broadcast %166 : vector<8x1xf32> to vector<8x8xf32>
    %168 = arith.subf %164, %167 : vector<8x8xf32>
    %169 = math.exp %168 : vector<8x8xf32>
    %cst_59 = arith.constant dense<0.000000e+00> : vector<8xf32>
    %170 = vector.multi_reduction <add>, %169, %cst_59 [1] : vector<8x8xf32> to vector<8xf32>
    %171 = vector.shape_cast %170 : vector<8xf32> to vector<8x1xf32>
    %172 = tpu.reciprocal %171 {approx = true} : vector<8x1xf32> -> vector<8x1xf32>
    %173 = vector.broadcast %172 : vector<8x1xf32> to vector<8x8xf32>
    %174 = arith.mulf %169, %173 : vector<8x8xf32>
    %cst_60 = arith.constant dense<0.000000e+00> : vector<8x8xf32>
    %175 = tpu.matmul %174, %162, %cst_60 {dimension_numbers = #tpu.dot_dimension_numbers<[1], [0], [0], [1], [0, 0, 1, 1], [], []>} : vector<8x8xf32>, vector<8x8xf32>, vector<8x8xf32> -> vector<8x8xf32>
    %cst_61 = arith.constant dense<0.000000e+00> : vector<8x32xf32>
    %176 = tpu.matmul %175, %25, %cst_61 {dimension_numbers = #tpu.dot_dimension_numbers<[1], [0], [0], [1], [0, 0, 1, 1], [], []>} : vector<8x8xf32>, vector<8x32xf32>, vector<8x32xf32> -> vector<8x32xf32>
    %177 = arith.addf %159, %176 : vector<8x32xf32>
    %178 = tpu.concatenate %101, %177 in 0 : vector<8x32xf32>, vector<8x32xf32> -> vector<16x32xf32>
    %c0_62 = arith.constant 0 : index
    %c0_63 = arith.constant 0 : index
    %179 = vector.load %arg10[%c0_62, %c0_63] : memref<1x32xf32, #tpu.memory_space<vmem>>, vector<1x32xf32>
    %180 = vector.broadcast %179 : vector<1x32xf32> to vector<16x32xf32>
    %181 = arith.addf %178, %180 : vector<16x32xf32>
    %182 = arith.addf %0, %181 : vector<16x32xf32>
    %c0_64 = arith.constant 0 : index
    %c0_65 = arith.constant 0 : index
    %183 = vector.load %arg15[%c0_64, %c0_65] : memref<1x32xf32, #tpu.memory_space<vmem>>, vector<1x32xf32>
    %c0_66 = arith.constant 0 : index
    %c0_67 = arith.constant 0 : index
    %184 = vector.load %arg16[%c0_66, %c0_67] : memref<1x32xf32, #tpu.memory_space<vmem>>, vector<1x32xf32>
    %cst_68 = arith.constant dense<0.000000e+00> : vector<16xf32>
    %185 = vector.multi_reduction <add>, %182, %cst_68 [1] : vector<16x32xf32> to vector<16xf32>
    %186 = vector.shape_cast %185 : vector<16xf32> to vector<16x1xf32>
    %cst_69 = arith.constant 3.200000e+01 : f32
    %187 = vector.broadcast %cst_69 : f32 to vector<16x1xf32>
    %188 = arith.divf %186, %187 : vector<16x1xf32>
    %189 = arith.mulf %182, %182 : vector<16x32xf32>
    %cst_70 = arith.constant dense<0.000000e+00> : vector<16xf32>
    %190 = vector.multi_reduction <add>, %189, %cst_70 [1] : vector<16x32xf32> to vector<16xf32>
    %191 = vector.shape_cast %190 : vector<16xf32> to vector<16x1xf32>
    %cst_71 = arith.constant 3.200000e+01 : f32
    %192 = vector.broadcast %cst_71 : f32 to vector<16x1xf32>
    %193 = arith.divf %191, %192 : vector<16x1xf32>
    %194 = arith.mulf %188, %188 : vector<16x1xf32>
    %195 = arith.subf %193, %194 : vector<16x1xf32>
    %196 = vector.broadcast %188 : vector<16x1xf32> to vector<16x32xf32>
    %197 = arith.subf %182, %196 : vector<16x32xf32>
    %cst_72 = arith.constant 9.99999974E-6 : f32
    %198 = vector.broadcast %cst_72 : f32 to vector<16x1xf32>
    %199 = arith.addf %195, %198 : vector<16x1xf32>
    %200 = math.rsqrt %199 : vector<16x1xf32>
    %201 = vector.broadcast %200 : vector<16x1xf32> to vector<16x32xf32>
    %202 = arith.mulf %197, %201 : vector<16x32xf32>
    %203 = vector.broadcast %183 : vector<1x32xf32> to vector<16x32xf32>
    %204 = arith.mulf %202, %203 : vector<16x32xf32>
    %205 = vector.broadcast %184 : vector<1x32xf32> to vector<16x32xf32>
    %206 = arith.addf %204, %205 : vector<16x32xf32>
    %207 = arith.truncf %181 : vector<16x32xf32> to vector<16x32xbf16>
    %c0_73 = arith.constant 0 : index
    %c0_74 = arith.constant 0 : index
    %208 = vector.load %arg11[%c0_73, %c0_74] : memref<32x64xbf16, #tpu.memory_space<vmem>>, vector<32x64xbf16>
    %cst_75 = arith.constant dense<0.000000e+00> : vector<16x64xf32>
    %209 = tpu.matmul %207, %208, %cst_75 {dimension_numbers = #tpu.dot_dimension_numbers<[1], [0], [0], [1], [0, 0, 1, 1], [], []>} : vector<16x32xbf16>, vector<32x64xbf16>, vector<16x64xf32> -> vector<16x64xf32>
    %c0_76 = arith.constant 0 : index
    %c0_77 = arith.constant 0 : index
    %210 = vector.load %arg12[%c0_76, %c0_77] : memref<1x64xf32, #tpu.memory_space<vmem>>, vector<1x64xf32>
    %211 = vector.broadcast %210 : vector<1x64xf32> to vector<16x64xf32>
    %212 = arith.addf %209, %211 : vector<16x64xf32>
    %cst_78 = arith.constant 0.000000e+00 : f32
    %213 = vector.broadcast %cst_78 : f32 to vector<16x64xf32>
    %214 = arith.maximumf %212, %213 : vector<16x64xf32>
    %215 = arith.truncf %214 : vector<16x64xf32> to vector<16x64xbf16>
    %c0_79 = arith.constant 0 : index
    %c0_80 = arith.constant 0 : index
    %216 = vector.load %arg13[%c0_79, %c0_80] : memref<64x32xbf16, #tpu.memory_space<vmem>>, vector<64x32xbf16>
    %cst_81 = arith.constant dense<0.000000e+00> : vector<16x32xf32>
    %217 = tpu.matmul %215, %216, %cst_81 {dimension_numbers = #tpu.dot_dimension_numbers<[1], [0], [0], [1], [0, 0, 1, 1], [], []>} : vector<16x64xbf16>, vector<64x32xbf16>, vector<16x32xf32> -> vector<16x32xf32>
    %c0_82 = arith.constant 0 : index
    %c0_83 = arith.constant 0 : index
    %218 = vector.load %arg14[%c0_82, %c0_83] : memref<1x32xf32, #tpu.memory_space<vmem>>, vector<1x32xf32>
    %219 = vector.broadcast %218 : vector<1x32xf32> to vector<16x32xf32>
    %220 = arith.addf %217, %219 : vector<16x32xf32>
    %221 = arith.addf %206, %220 : vector<16x32xf32>
    %c0_84 = arith.constant 0 : index
    %c0_85 = arith.constant 0 : index
    %222 = vector.load %arg17[%c0_84, %c0_85] : memref<1x32xf32, #tpu.memory_space<vmem>>, vector<1x32xf32>
    %c0_86 = arith.constant 0 : index
    %c0_87 = arith.constant 0 : index
    %223 = vector.load %arg18[%c0_86, %c0_87] : memref<1x32xf32, #tpu.memory_space<vmem>>, vector<1x32xf32>
    %cst_88 = arith.constant dense<0.000000e+00> : vector<16xf32>
    %224 = vector.multi_reduction <add>, %221, %cst_88 [1] : vector<16x32xf32> to vector<16xf32>
    %225 = vector.shape_cast %224 : vector<16xf32> to vector<16x1xf32>
    %cst_89 = arith.constant 3.200000e+01 : f32
    %226 = vector.broadcast %cst_89 : f32 to vector<16x1xf32>
    %227 = arith.divf %225, %226 : vector<16x1xf32>
    %228 = arith.mulf %221, %221 : vector<16x32xf32>
    %cst_90 = arith.constant dense<0.000000e+00> : vector<16xf32>
    %229 = vector.multi_reduction <add>, %228, %cst_90 [1] : vector<16x32xf32> to vector<16xf32>
    %230 = vector.shape_cast %229 : vector<16xf32> to vector<16x1xf32>
    %cst_91 = arith.constant 3.200000e+01 : f32
    %231 = vector.broadcast %cst_91 : f32 to vector<16x1xf32>
    %232 = arith.divf %230, %231 : vector<16x1xf32>
    %233 = arith.mulf %227, %227 : vector<16x1xf32>
    %234 = arith.subf %232, %233 : vector<16x1xf32>
    %235 = vector.broadcast %227 : vector<16x1xf32> to vector<16x32xf32>
    %236 = arith.subf %221, %235 : vector<16x32xf32>
    %cst_92 = arith.constant 9.99999974E-6 : f32
    %237 = vector.broadcast %cst_92 : f32 to vector<16x1xf32>
    %238 = arith.addf %234, %237 : vector<16x1xf32>
    %239 = math.rsqrt %238 : vector<16x1xf32>
    %240 = vector.broadcast %239 : vector<16x1xf32> to vector<16x32xf32>
    %241 = arith.mulf %236, %240 : vector<16x32xf32>
    %242 = vector.broadcast %222 : vector<1x32xf32> to vector<16x32xf32>
    %243 = arith.mulf %241, %242 : vector<16x32xf32>
    %244 = vector.broadcast %223 : vector<1x32xf32> to vector<16x32xf32>
    %245 = arith.addf %243, %244 : vector<16x32xf32>
    %c0_93 = arith.constant 0 : index
    %c0_94 = arith.constant 0 : index
    %246 = vector.load %arg19[%c0_93, %c0_94] : memref<16x32xf32, #tpu.memory_space<vmem>>, vector<16x32xf32>
    tpu.vector_store %arg19[%c0_93, %c0_94], %245 {strides = array<i32>} : memref<16x32xf32, #tpu.memory_space<vmem>>, vector<16x32xf32>,
    return
  }
  func.func @transform_0(%arg0: i32) -> (i32, i32) {
    %c0_i32 = arith.constant 0 : i32
    %c0_i32_0 = arith.constant 0 : i32
    %c0_i32_1 = arith.constant 0 : i32
    return %c0_i32, %c0_i32_0 : i32, i32
  }
  func.func @transform_1(%arg0: i32) -> (i32, i32) {
    %c0_i32 = arith.constant 0 : i32
    %c0_i32_0 = arith.constant 0 : i32
    %c0_i32_1 = arith.constant 0 : i32
    return %c0_i32, %c0_i32_0 : i32, i32
  }
  func.func @transform_2(%arg0: i32) -> (i32, i32) {
    %c0_i32 = arith.constant 0 : i32
    %c0_i32_0 = arith.constant 0 : i32
    %c0_i32_1 = arith.constant 0 : i32
    return %c0_i32, %c0_i32_0 : i32, i32
  }
  func.func @transform_3(%arg0: i32) -> (i32, i32) {
    %c0_i32 = arith.constant 0 : i32
    %c0_i32_0 = arith.constant 0 : i32
    %c0_i32_1 = arith.constant 0 : i32
    return %c0_i32, %c0_i32_0 : i32, i32
  }
  func.func @transform_4(%arg0: i32) -> (i32, i32) {
    %c0_i32 = arith.constant 0 : i32
    %c0_i32_0 = arith.constant 0 : i32
    %c0_i32_1 = arith.constant 0 : i32
    return %c0_i32, %c0_i32_0 : i32, i32
  }
  func.func @transform_5(%arg0: i32) -> (i32, i32) {
    %c0_i32 = arith.constant 0 : i32
    %c0_i32_0 = arith.constant 0 : i32
    %c0_i32_1 = arith.constant 0 : i32
    return %c0_i32, %c0_i32_0 : i32, i32
  }
  func.func @transform_6(%arg0: i32) -> (i32, i32) {
    %c0_i32 = arith.constant 0 : i32
    %c0_i32_0 = arith.constant 0 : i32
    %c0_i32_1 = arith.constant 0 : i32
    return %c0_i32, %c0_i32_0 : i32, i32
  }
  func.func @transform_7(%arg0: i32) -> (i32, i32) {
    %c0_i32 = arith.constant 0 : i32
    %c0_i32_0 = arith.constant 0 : i32
    %c0_i32_1 = arith.constant 0 : i32
    return %c0_i32, %c0_i32_0 : i32, i32
  }
  func.func @transform_8(%arg0: i32) -> (i32, i32) {
    %c0_i32 = arith.constant 0 : i32
    %c0_i32_0 = arith.constant 0 : i32
    %c0_i32_1 = arith.constant 0 : i32
    return %c0_i32, %c0_i32_0 : i32, i32
  }
  func.func @transform_9(%arg0: i32) -> (i32, i32) {
    %c0_i32 = arith.constant 0 : i32
    %c0_i32_0 = arith.constant 0 : i32
    %c0_i32_1 = arith.constant 0 : i32
    return %c0_i32, %c0_i32_0 : i32, i32
  }
  func.func @transform_10(%arg0: i32) -> (i32, i32) {
    %c0_i32 = arith.constant 0 : i32
    %c0_i32_0 = arith.constant 0 : i32
    %c0_i32_1 = arith.constant 0 : i32
    return %c0_i32, %c0_i32_0 : i32, i32
  }
  func.func @transform_11(%arg0: i32) -> (i32, i32) {
    %c0_i32 = arith.constant 0 : i32
    %c0_i32_0 = arith.constant 0 : i32
    %c0_i32_1 = arith.constant 0 : i32
    return %c0_i32, %c0_i32_0 : i32, i32
  }
  func.func @transform_12(%arg0: i32) -> (i32, i32) {
    %c0_i32 = arith.constant 0 : i32
    %c0_i32_0 = arith.constant 0 : i32
    %c0_i32_1 = arith.constant 0 : i32
    return %c0_i32, %c0_i32_0 : i32, i32
  }
  func.func @transform_13(%arg0: i32) -> (i32, i32) {
    %c0_i32 = arith.constant 0 : i32
    %c0_i32_0 = arith.constant 0 : i32
    %c0_i32_1 = arith.constant 0 : i32
    return %c0_i32, %c0_i32_0 : i32, i32
  }
  func.func @transform_14(%arg0: i32) -> (i32, i32) {
    %c0_i32 = arith.constant 0 : i32
    %c0_i32_0 = arith.constant 0 : i32
    %c0_i32_1 = arith.constant 0 : i32
    return %c0_i32, %c0_i32_0 : i32, i32
  }
  func.func @transform_15(%arg0: i32) -> (i32, i32) {
    %c0_i32 = arith.constant 0 : i32
    %c0_i32_0 = arith.constant 0 : i32
    %c0_i32_1 = arith.constant 0 : i32
    return %c0_i32, %c0_i32_0 : i32, i32
  }
  func.func @transform_16(%arg0: i32) -> (i32, i32) {
    %c0_i32 = arith.constant 0 : i32
    %c0_i32_0 = arith.constant 0 : i32
    %c0_i32_1 = arith.constant 0 : i32
    return %c0_i32, %c0_i32_0 : i32, i32
  }
  func.func @transform_17(%arg0: i32) -> (i32, i32) {
    %c0_i32 = arith.constant 0 : i32
    %c0_i32_0 = arith.constant 0 : i32
    %c0_i32_1 = arith.constant 0 : i32
    return %c0_i32, %c0_i32_0 : i32, i32
  }
  func.func @transform_18(%arg0: i32) -> (i32, i32) {
    %c0_i32 = arith.constant 0 : i32
    %c0_i32_0 = arith.constant 0 : i32
    %c0_i32_1 = arith.constant 0 : i32
    return %c0_i32, %c0_i32_0 : i32, i32
  }
}

</mosaic_0001>

<llo_original>
// kernel: tpu_custom_call.1
$region0: #{tpu_custom_call.1}
  #allocation0 [shape = 'u32[]', space=smem, size = 0x4, offset = 0x4, fixed_abs, tag = 'smem constant byte address 0x4 - core index']
  #allocation1 [shape = 'u32[72,128]{1,0:T(1,128)}', space=vmem, size = 0x9000, scoped, tag = 'internal scratch']
  %s0 = inlined_call_operand.vmem [shape: f32[16,32], index: 0, kind: input, shape index: {}]
  %s1 = inlined_call_operand.hbm [shape: f32[16,32], index: 1, kind: input, shape index: {}]
  %s2 = inlined_call_operand.hbm [shape: bf16[32,32], index: 2, kind: input, shape index: {}]
  %s3 = inlined_call_operand.vmem [shape: f32[1,32], index: 3, kind: input, shape index: {}]
  %s4 = inlined_call_operand.hbm [shape: bf16[32,32], index: 4, kind: input, shape index: {}]
  %s5 = inlined_call_operand.vmem [shape: f32[1,32], index: 5, kind: input, shape index: {}]
  %s6 = inlined_call_operand.hbm [shape: bf16[32,32], index: 6, kind: input, shape index: {}]
  %s7 = inlined_call_operand.vmem [shape: f32[1,32], index: 7, kind: input, shape index: {}]
  %s8 = inlined_call_operand.vmem [shape: f32[32,32], index: 8, kind: input, shape index: {}]
  %s9 = inlined_call_operand.vmem [shape: f32[1,32], index: 9, kind: input, shape index: {}]
  %s10 = inlined_call_operand.hbm [shape: bf16[32,64], index: 10, kind: input, shape index: {}]
  %s11 = inlined_call_operand.vmem [shape: f32[1,64], index: 11, kind: input, shape index: {}]
  %s12 = inlined_call_operand.vmem [shape: bf16[64,32], index: 12, kind: input, shape index: {}]
  %s13 = inlined_call_operand.vmem [shape: f32[1,32], index: 13, kind: input, shape index: {}]
  %s14 = inlined_call_operand.vmem [shape: f32[1,32], index: 14, kind: input, shape index: {}]
  %s15 = inlined_call_operand.vmem [shape: f32[1,32], index: 15, kind: input, shape index: {}]
  %s16 = inlined_call_operand.vmem [shape: f32[1,32], index: 16, kind: input, shape index: {}]
  %s17 = inlined_call_operand.vmem [shape: f32[1,32], index: 17, kind: input, shape index: {}]
  %s18 = inlined_call_operand.hbm [shape: f32[16,32], index: 18, kind: output, shape index: {}]
  %s19 = sld [smem:[#allocation0]]
  $region102: #{tpu_custom_call.1} parent=0
    _
  %s21 = ssub.s32 1, %s19
  %s22 = scalar_select 0, %s21, %s19
  $region1: #{tpu_custom_call.1} parent=0
    #allocation2 [shape = 'u8[8192]{0}', space=vmem, size = 0x2000, scoped, tag = 'input window, operand 1, single buffered']
    #allocation3 [shape = 's32[1]{0}', space=sflag, size = 0x4, scoped, tag = 'scoped memory for tpu_custom_call.1']
    #allocation4 [shape = 's32[1]{0}', space=sflag, size = 0x4, scoped, tag = 'scoped memory for tpu_custom_call.1']
    #allocation5 [shape = 'u8[8192]{0}', space=vmem, size = 0x2000, scoped, tag = 'input window, operand 2, single buffered']
    #allocation6 [shape = 's32[1]{0}', space=sflag, size = 0x4, scoped, tag = 'scoped memory for tpu_custom_call.1']
    #allocation7 [shape = 'u8[8192]{0}', space=vmem, size = 0x2000, scoped, tag = 'input window, operand 4, single buffered']
    #allocation8 [shape = 'u8[8192]{0}', space=vmem, size = 0x2000, scoped, tag = 'input window, operand 6, single buffered']
    #allocation9 [shape = 's32[1]{0}', space=sflag, size = 0x4, scoped, tag = 'scoped memory for tpu_custom_call.1']
    #allocation10 [shape = 'u8[8192]{0}', space=vmem, size = 0x2000, scoped, tag = 'input window, operand 10, single buffered']
    #allocation11 [shape = 'u8[8192]{0}', space=vmem, size = 0x2000, scoped, tag = 'output window, operand 0, single buffered']
    %23 = vsyncpa [#allocation3], 0
    %24 = vsyncpa [#allocation6], 0
    %25 = vsyncpa [#allocation9], 0
    %26 = vsyncpa [#allocation4], 0
    // Predicated region
    $region2: #{tpu_custom_call.1} parent=1 // pred_check
      _
    $region3: #{tpu_custom_call.1} parent=1 // pred_check_branch
      %28 = sbr.rel (0) target = $region5
    $region4: #{tpu_custom_call.1} parent=1 // pred_region
      _
    $region5: #{tpu_custom_call.1} parent=1 // pred_fallthru
      _
    // Predicated region
    $region6: #{tpu_custom_call.1} parent=1 // pred_check
      _
    $region7: #{tpu_custom_call.1} parent=1 // pred_check_branch
      %30 = sbr.rel (0) target = $region9
    $region8: #{tpu_custom_call.1} parent=1 // pred_region
      %32 = vsyncadd [#allocation3], 0
      %s33 = sshll.u32 %s1, 4
      %s34 = int_to_ptr.hbm [resolvable:$true] %s33
      %s35 = sshll.u32 [#allocation2], 4
      %s36 = int_to_ptr.vmem [resolvable:$true] %s35
      %41 = dma.hbm_to_vmem [thread:$0]  %s34, 256, %s36, [#allocation3], 128, 128, 8
    $region9: #{tpu_custom_call.1} parent=1 // pred_fallthru
      _
    // Predicated region
    $region10: #{tpu_custom_call.1} parent=1 // pred_check
      _
    $region11: #{tpu_custom_call.1} parent=1 // pred_check_branch
      %43 = sbr.rel (0) target = $region13
    $region12: #{tpu_custom_call.1} parent=1 // pred_region
      %45 = vsyncadd [#allocation6], 0
      %s46 = sshll.u32 %s2, 4
      %s47 = int_to_ptr.hbm [resolvable:$true] %s46
      %s48 = sshll.u32 [#allocation5], 4
      %s49 = int_to_ptr.vmem [resolvable:$true] %s48
      %54 = dma.hbm_to_vmem [thread:$0]  %s47, 256, %s49, [#allocation6], 64, 64, 4
    $region13: #{tpu_custom_call.1} parent=1 // pred_fallthru
      _
    // Predicated region
    $region14: #{tpu_custom_call.1} parent=1 // pred_check
      _
    $region15: #{tpu_custom_call.1} parent=1 // pred_check_branch
      %56 = sbr.rel (0) target = $region17
    $region16: #{tpu_custom_call.1} parent=1 // pred_region
      _
    $region17: #{tpu_custom_call.1} parent=1 // pred_fallthru
      _
    // Predicated region
    $region18: #{tpu_custom_call.1} parent=1 // pred_check
      _
    $region19: #{tpu_custom_call.1} parent=1 // pred_check_branch
      %58 = sbr.rel (0) target = $region21
    $region20: #{tpu_custom_call.1} parent=1 // pred_region
      %60 = vsyncadd [#allocation6], 0
      %s61 = sshll.u32 %s4, 4
      %s62 = int_to_ptr.hbm [resolvable:$true] %s61
      %s63 = sshll.u32 [#allocation7], 4
      %s64 = int_to_ptr.vmem [resolvable:$true] %s63
      %69 = dma.hbm_to_vmem [thread:$0]  %s62, 256, %s64, [#allocation6], 64, 64, 4
    $region21: #{tpu_custom_call.1} parent=1 // pred_fallthru
      _
    // Predicated region
    $region22: #{tpu_custom_call.1} parent=1 // pred_check
      _
    $region23: #{tpu_custom_call.1} parent=1 // pred_check_branch
      %71 = sbr.rel (0) target = $region25
    $region24: #{tpu_custom_call.1} parent=1 // pred_region
      _
    $region25: #{tpu_custom_call.1} parent=1 // pred_fallthru
      _
    // Predicated region
    $region26: #{tpu_custom_call.1} parent=1 // pred_check
      _
    $region27: #{tpu_custom_call.1} parent=1 // pred_check_branch
      %73 = sbr.rel (0) target = $region29
    $region28: #{tpu_custom_call.1} parent=1 // pred_region
      %75 = vsyncadd [#allocation9], 0
      %s76 = sshll.u32 %s6, 4
      %s77 = int_to_ptr.hbm [resolvable:$true] %s76
      %s78 = sshll.u32 [#allocation8], 4
      %s79 = int_to_ptr.vmem [resolvable:$true] %s78
      %84 = dma.hbm_to_vmem [thread:$0]  %s77, 256, %s79, [#allocation9], 64, 64, 4
    $region29: #{tpu_custom_call.1} parent=1 // pred_fallthru
      _
    // Predicated region
    $region30: #{tpu_custom_call.1} parent=1 // pred_check
      _
    $region31: #{tpu_custom_call.1} parent=1 // pred_check_branch
      %86 = sbr.rel (0) target = $region33
    $region32: #{tpu_custom_call.1} parent=1 // pred_region
      _
    $region33: #{tpu_custom_call.1} parent=1 // pred_fallthru
      _
    // Predicated region
    $region34: #{tpu_custom_call.1} parent=1 // pred_check
      _
    $region35: #{tpu_custom_call.1} parent=1 // pred_check_branch
      %88 = sbr.rel (0) target = $region37
    $region36: #{tpu_custom_call.1} parent=1 // pred_region
      _
    $region37: #{tpu_custom_call.1} parent=1 // pred_fallthru
      _
    // Predicated region
    $region38: #{tpu_custom_call.1} parent=1 // pred_check
      _
    $region39: #{tpu_custom_call.1} parent=1 // pred_check_branch
      %90 = sbr.rel (0) target = $region41
    $region40: #{tpu_custom_call.1} parent=1 // pred_region
      _
    $region41: #{tpu_custom_call.1} parent=1 // pred_fallthru
      _
    // Predicated region
    $region42: #{tpu_custom_call.1} parent=1 // pred_check
      _
    $region43: #{tpu_custom_call.1} parent=1 // pred_check_branch
      %92 = sbr.rel (0) target = $region45
    $region44: #{tpu_custom_call.1} parent=1 // pred_region
      %94 = vsyncadd [#allocation9], 0
      %s95 = sshll.u32 %s10, 4
      %s96 = int_to_ptr.hbm [resolvable:$true] %s95
      %s97 = sshll.u32 [#allocation10], 4
      %s98 = int_to_ptr.vmem [resolvable:$true] %s97
      %103 = dma.hbm_to_vmem [thread:$0]  %s96, 256, %s98, [#allocation9], 64, 64, 4
    $region45: #{tpu_custom_call.1} parent=1 // pred_fallthru
      _
    // Predicated region
    $region46: #{tpu_custom_call.1} parent=1 // pred_check
      _
    $region47: #{tpu_custom_call.1} parent=1 // pred_check_branch
      %105 = sbr.rel (0) target = $region49
    $region48: #{tpu_custom_call.1} parent=1 // pred_region
      _
    $region49: #{tpu_custom_call.1} parent=1 // pred_fallthru
      _
    // Predicated region
    $region50: #{tpu_custom_call.1} parent=1 // pred_check
      _
    $region51: #{tpu_custom_call.1} parent=1 // pred_check_branch
      %107 = sbr.rel (0) target = $region53
    $region52: #{tpu_custom_call.1} parent=1 // pred_region
      _
    $region53: #{tpu_custom_call.1} parent=1 // pred_fallthru
      _
    // Predicated region
    $region54: #{tpu_custom_call.1} parent=1 // pred_check
      _
    $region55: #{tpu_custom_call.1} parent=1 // pred_check_branch
      %109 = sbr.rel (0) target = $region57
    $region56: #{tpu_custom_call.1} parent=1 // pred_region
      _
    $region57: #{tpu_custom_call.1} parent=1 // pred_fallthru
      _
    // Predicated region
    $region58: #{tpu_custom_call.1} parent=1 // pred_check
      _
    $region59: #{tpu_custom_call.1} parent=1 // pred_check_branch
      %111 = sbr.rel (0) target = $region61
    $region60: #{tpu_custom_call.1} parent=1 // pred_region
      _
    $region61: #{tpu_custom_call.1} parent=1 // pred_fallthru
      _
    // Predicated region
    $region62: #{tpu_custom_call.1} parent=1 // pred_check
      _
    $region63: #{tpu_custom_call.1} parent=1 // pred_check_branch
      %113 = sbr.rel (0) target = $region65
    $region64: #{tpu_custom_call.1} parent=1 // pred_region
      _
    $region65: #{tpu_custom_call.1} parent=1 // pred_fallthru
      _
    // Predicated region
    $region66: #{tpu_custom_call.1} parent=1 // pred_check
      _
    $region67: #{tpu_custom_call.1} parent=1 // pred_check_branch
      %115 = sbr.rel (0) target = $region69
    $region68: #{tpu_custom_call.1} parent=1 // pred_region
      _
    $region69: #{tpu_custom_call.1} parent=1 // pred_fallthru
      _
    // Predicated region
    $region70: #{tpu_custom_call.1} parent=1 // pred_check
      _
    $region71: #{tpu_custom_call.1} parent=1 // pred_check_branch
      %117 = sbr.rel (0) target = $region73
    $region72: #{tpu_custom_call.1} parent=1 // pred_region
      _
    $region73: #{tpu_custom_call.1} parent=1 // pred_fallthru
      _
    // Predicated region
    $region74: #{tpu_custom_call.1} parent=1 // pred_check
      _
    $region75: #{tpu_custom_call.1} parent=1 // pred_check_branch
      %119 = sbr.rel (0) target = $region77
    $region76: #{tpu_custom_call.1} parent=1 // pred_region
      %121 = dma.done [#allocation3], 256
    $region77: #{tpu_custom_call.1} parent=1 // pred_fallthru
      _
    // Predicated region
    $region78: #{tpu_custom_call.1} parent=1 // pred_check
      _
    $region79: #{tpu_custom_call.1} parent=1 // pred_check_branch
      %123 = sbr.rel (0) target = $region81
    $region80: #{tpu_custom_call.1} parent=1 // pred_region
      %125 = dma.done [#allocation6], 256
    $region81: #{tpu_custom_call.1} parent=1 // pred_fallthru
      _
    // Predicated region
    $region82: #{tpu_custom_call.1} parent=1 // pred_check
      _
    $region83: #{tpu_custom_call.1} parent=1 // pred_check_branch
      %127 = sbr.rel (0) target = $region85
    $region84: #{tpu_custom_call.1} parent=1 // pred_region
      %129 = dma.done [#allocation6], 256
    $region85: #{tpu_custom_call.1} parent=1 // pred_fallthru
      _
    // Predicated region
    $region86: #{tpu_custom_call.1} parent=1 // pred_check
      _
    $region87: #{tpu_custom_call.1} parent=1 // pred_check_branch
      %131 = sbr.rel (0) target = $region89
    $region88: #{tpu_custom_call.1} parent=1 // pred_region
      %133 = dma.done [#allocation9], 256
    $region89: #{tpu_custom_call.1} parent=1 // pred_fallthru
      _
    // Predicated region
    $region90: #{tpu_custom_call.1} parent=1 // pred_check
      _
    $region91: #{tpu_custom_call.1} parent=1 // pred_check_branch
      %135 = sbr.rel (0) target = $region93
    $region92: #{tpu_custom_call.1} parent=1 // pred_region
      %137 = dma.done [#allocation9], 256
    $region93: #{tpu_custom_call.1} parent=1 // pred_fallthru
      _
    %v139 = vld [vmem:[%s0] sm:$0xff]
    %v140 = vld [vmem:[%s0 + $0x8] sm:$0xff]
    %v141 = vld [vmem:[#allocation2] sm:$0xff]
    %v142 = vld [vmem:[#allocation2 + $0x8] sm:$0xff]
    %v143 = vpack.c.bf16 %v140, %v139
    %v144 = vpack.c.bf16 %v142, %v141
    %v145 = vld [vmem:[#allocation5] sm:$0xf]
    %v146 = vld [vmem:[#allocation5 + $0x4] sm:$0xf]
    %v147 = vld [vmem:[#allocation5 + $0x8] sm:$0xf]
    %v148 = vld [vmem:[#allocation5 + $0xc] sm:$0xf]
    %v149 = vld [vmem:[%s3] sm:$0x1]
    %v151 = vperm.slane %v149, 0
    %v157 = vunpack.c.l.b16 %v145
    %v158 = vunpack.c.l.b16 %v146
    %v159 = vunpack.c.l.b16 %v147
    %v160 = vunpack.c.l.b16 %v148
    %v161 = vpack.c.b16 %v158, %v157
    %v162 = vpack.c.b16 %v160, %v159
    %vm165 = vcmask 261120
    %v167 = vsel %vm165, %v143, 0
    %169 = vmatpush.bf16.msra.mxu0 0
    %170 = vmatpush.bf16.msra.mxu0 0
    %171 = vmatpush.bf16.msra.mxu0 0
    %172 = vmatpush.bf16.msra.mxu0 0
    %173 = vmatpush.bf16.msra.mxu0 0
    %174 = vmatpush.bf16.msra.mxu0 0
    %175 = vmatpush.bf16.msra.mxu0 %v162
    %176 = vmatpush.bf16.msra.mxu0 %v161
    %177 = vmatmul.bf16.gmra.mxu0 %v167
    %v178 = vpop.f32.mrf.mxu0
    %v179 = vadd.f32 %v151, %v178
    %v180 = vpop.f32.mrf.mxu0
    %v181 = vadd.f32 %v151, %v180
    %182 = vdwg.mxu0
    %v183 = vld [vmem:[#allocation7] sm:$0xf]
    %v184 = vld [vmem:[#allocation7 + $0x4] sm:$0xf]
    %v185 = vld [vmem:[#allocation7 + $0x8] sm:$0xf]
    %v186 = vld [vmem:[#allocation7 + $0xc] sm:$0xf]
    %v187 = vld [vmem:[%s5] sm:$0x1]
    %v189 = vperm.slane %v187, 0
    %v195 = vunpack.c.l.b16 %v183
    %v196 = vunpack.c.l.b16 %v184
    %v197 = vunpack.c.l.b16 %v185
    %v198 = vunpack.c.l.b16 %v186
    %v199 = vpack.c.b16 %v196, %v195
    %v200 = vpack.c.b16 %v198, %v197
    %v204 = vsel %vm165, %v144, 0
    %206 = vmatpush.bf16.msra.mxu0 0
    %207 = vmatpush.bf16.msra.mxu0 0
    %208 = vmatpush.bf16.msra.mxu0 0
    %209 = vmatpush.bf16.msra.mxu0 0
    %210 = vmatpush.bf16.msra.mxu0 0
    %211 = vmatpush.bf16.msra.mxu0 0
    %212 = vmatpush.bf16.msra.mxu0 %v200
    %213 = vmatpush.bf16.msra.mxu0 %v199
    %214 = vmatmul.bf16.gmra.mxu0 %v204
    %v215 = vpop.f32.mrf.mxu0
    %v216 = vadd.f32 %v189, %v215
    %v217 = vpop.f32.mrf.mxu0
    %v218 = vadd.f32 %v189, %v217
    %219 = vdwg.mxu0
    %v220 = vld [vmem:[#allocation8] sm:$0xf]
    %v221 = vld [vmem:[#allocation8 + $0x4] sm:$0xf]
    %v222 = vld [vmem:[#allocation8 + $0x8] sm:$0xf]
    %v223 = vld [vmem:[#allocation8 + $0xc] sm:$0xf]
    %v224 = vld [vmem:[%s7] sm:$0x1]
    %v226 = vperm.slane %v224, 0
    %v232 = vunpack.c.l.b16 %v220
    %v233 = vunpack.c.l.b16 %v221
    %v234 = vunpack.c.l.b16 %v222
    %v235 = vunpack.c.l.b16 %v223
    %v236 = vpack.c.b16 %v233, %v232
    %v237 = vpack.c.b16 %v235, %v234
    %240 = vmatpush.bf16.msra.mxu0 0
    %241 = vmatpush.bf16.msra.mxu0 0
    %242 = vmatpush.bf16.msra.mxu0 0
    %243 = vmatpush.bf16.msra.mxu0 0
    %244 = vmatpush.bf16.msra.mxu0 0
    %245 = vmatpush.bf16.msra.mxu0 0
    %246 = vmatpush.bf16.msra.mxu0 %v237
    %247 = vmatpush.bf16.msra.mxu0 %v236
    %248 = vmatmul.bf16.gmra.mxu0 %v204
    %v249 = vpop.f32.mrf.mxu0
    %v250 = vadd.f32 %v226, %v249
    %v251 = vpop.f32.mrf.mxu0
    %v252 = vadd.f32 %v226, %v251
    %253 = vdwg.mxu0
    %v254 = vmul.f32 %v179, 0.35355338
    %v255 = vmul.f32 %v181, 0.35355338
    %v256 = vld [vmem:[%s8] sm:$0xff]
    %v257 = vld [vmem:[%s8 + $0x8] sm:$0xff]
    %v258 = vld [vmem:[%s8 + $0x10] sm:$0xff]
    %v259 = vld [vmem:[%s8 + $0x18] sm:$0xff]
    %vm260 = vcmask 64512
    %v262 = vsel %vm260, %v254, 0
    %v265 = vsel %vm260, %v216, 0
    %267 = vmatpush.xpose.msra.mxu0 0.0
    %268 = vmatpush.xpose.msra.mxu0 0.0
    %269 = vmatpush.xpose.msra.mxu0 0.0
    %270 = vmatpush.xpose.msra.mxu0 0.0
    %271 = vmatpush.xpose.msra.mxu0 0.0
    %272 = vmatpush.xpose.msra.mxu0 0.0
    %273 = vmatpush.xpose.msra.mxu0 0.0
    %274 = vmatpush.xpose.msra.mxu0 0.0
    %275 = vmatpush.xpose.msra.mxu0 0.0
    %276 = vmatpush.xpose.msra.mxu0 0.0
    %277 = vmatpush.xpose.msra.mxu0 0.0
    %278 = vmatpush.xpose.msra.mxu0 0.0
    %279 = vmatpush.xpose.msra.mxu0 0.0
    %280 = vmatpush.xpose.msra.mxu0 0.0
    %281 = vmatpush.xpose.msra.mxu0 0.0
    %282 = vmatpush.xpose.msra.mxu0 %v265
    %283 = vmatmul.f32.gmra.mxu0 %v262
    %v284 = vpop.f32.mrf.mxu0
    %v285 = vadd.f32 0.0, %v284
    %286 = vdwg.mxu0
    %v287 = vsel %vm260, %v285, -inf
    %288 = vmax.xlane.f32.xlu0 %v287
    %v289 = vpop.xlane.xlu0 %288
    %v290 = vsub.f32 %v285, %v289
    %v291 = vmul.f32 %v290, 1.442695
    %v292 = vpow.pop %v291
    %v293 = vsel %vm260, %v292, 0.0
    %294 = vadd.xlane.f32.xlu0 %v293
    %v295 = vpop.xlane.xlu0 %294
    %v296 = vrcp.pop %v295
    %v297 = vmul.f32 %v292, %v296
    %v299 = vsel %vm260, %v297, 0
    %301 = vmatpush.msra.mxu0 0.0
    %302 = vmatpush.msra.mxu0 0.0
    %303 = vmatpush.msra.mxu0 0.0
    %304 = vmatpush.msra.mxu0 0.0
    %305 = vmatpush.msra.mxu0 0.0
    %306 = vmatpush.msra.mxu0 0.0
    %307 = vmatpush.msra.mxu0 0.0
    %308 = vmatpush.msra.mxu0 0.0
    %309 = vmatpush.msra.mxu0 0.0
    %310 = vmatpush.msra.mxu0 0.0
    %311 = vmatpush.msra.mxu0 0.0
    %312 = vmatpush.msra.mxu0 0.0
    %313 = vmatpush.msra.mxu0 0.0
    %314 = vmatpush.msra.mxu0 0.0
    %315 = vmatpush.msra.mxu0 0.0
    %316 = vmatpush.msra.mxu0 %v250
    %317 = vmatmul.f32.gmra.mxu0 %v299
    %v318 = vpop.f32.mrf.mxu0
    %v319 = vadd.f32 0.0, %v318
    %320 = vdwg.mxu0
    %321 = vrot.lane.b32.xlu0 %v254, 120
    %v322 = vpop.permute.xlu0 %321
    %323 = vrot.lane.b32.xlu0 %v216, 120
    %v324 = vpop.permute.xlu0 %323
    %v325 = vsel %vm260, %v322, 0
    %v327 = vsel %vm260, %v324, 0
    %329 = vmatpush.xpose.msra.mxu0 0.0
    %330 = vmatpush.xpose.msra.mxu0 0.0
    %331 = vmatpush.xpose.msra.mxu0 0.0
    %332 = vmatpush.xpose.msra.mxu0 0.0
    %333 = vmatpush.xpose.msra.mxu0 0.0
    %334 = vmatpush.xpose.msra.mxu0 0.0
    %335 = vmatpush.xpose.msra.mxu0 0.0
    %336 = vmatpush.xpose.msra.mxu0 0.0
    %337 = vmatpush.xpose.msra.mxu0 0.0
    %338 = vmatpush.xpose.msra.mxu0 0.0
    %339 = vmatpush.xpose.msra.mxu0 0.0
    %340 = vmatpush.xpose.msra.mxu0 0.0
    %341 = vmatpush.xpose.msra.mxu0 0.0
    %342 = vmatpush.xpose.msra.mxu0 0.0
    %343 = vmatpush.xpose.msra.mxu0 0.0
    %344 = vmatpush.xpose.msra.mxu0 %v327
    %345 = vmatmul.f32.gmra.mxu0 %v325
    %v346 = vpop.f32.mrf.mxu0
    %v347 = vadd.f32 0.0, %v346
    %348 = vdwg.mxu0
    %v349 = vsel %vm260, %v347, -inf
    %350 = vmax.xlane.f32.xlu0 %v349
    %v351 = vpop.xlane.xlu0 %350
    %v352 = vsub.f32 %v347, %v351
    %v353 = vmul.f32 %v352, 1.442695
    %v354 = vpow.pop %v353
    %v355 = vsel %vm260, %v354, 0.0
    %356 = vadd.xlane.f32.xlu0 %v355
    %v357 = vpop.xlane.xlu0 %356
    %v358 = vrcp.pop %v357
    %v359 = vmul.f32 %v354, %v358
    %361 = vrot.lane.b32.xlu0 %v250, 120
    %v362 = vpop.permute.xlu0 %361
    %v365 = vsel %vm260, %v359, 0
    %367 = vmatpush.msra.mxu0 0.0
    %368 = vmatpush.msra.mxu0 0.0
    %369 = vmatpush.msra.mxu0 0.0
    %370 = vmatpush.msra.mxu0 0.0
    %371 = vmatpush.msra.mxu0 0.0
    %372 = vmatpush.msra.mxu0 0.0
    %373 = vmatpush.msra.mxu0 0.0
    %374 = vmatpush.msra.mxu0 0.0
    %375 = vmatpush.msra.mxu0 0.0
    %376 = vmatpush.msra.mxu0 0.0
    %377 = vmatpush.msra.mxu0 0.0
    %378 = vmatpush.msra.mxu0 0.0
    %379 = vmatpush.msra.mxu0 0.0
    %380 = vmatpush.msra.mxu0 0.0
    %381 = vmatpush.msra.mxu0 0.0
    %382 = vmatpush.msra.mxu0 %v362
    %383 = vmatmul.f32.gmra.mxu0 %v365
    %v384 = vpop.f32.mrf.mxu0
    %v385 = vadd.f32 0.0, %v384
    %386 = vdwg.mxu0
    %v388 = vsel %vm260, %v385, 0
    %390 = vmatpush.msra.mxu0 0.0
    %391 = vmatpush.msra.mxu0 0.0
    %392 = vmatpush.msra.mxu0 0.0
    %393 = vmatpush.msra.mxu0 0.0
    %394 = vmatpush.msra.mxu0 0.0
    %395 = vmatpush.msra.mxu0 0.0
    %396 = vmatpush.msra.mxu0 0.0
    %397 = vmatpush.msra.mxu0 0.0
    %398 = vmatpush.msra.mxu0 0.0
    %399 = vmatpush.msra.mxu0 0.0
    %400 = vmatpush.msra.mxu0 0.0
    %401 = vmatpush.msra.mxu0 0.0
    %402 = vmatpush.msra.mxu0 0.0
    %403 = vmatpush.msra.mxu0 0.0
    %404 = vmatpush.msra.mxu0 0.0
    %405 = vmatpush.msra.mxu0 %v257
    %406 = vmatmul.f32.gmra.mxu0 %v388
    %v407 = vpop.f32.mrf.mxu0
    %v408 = vadd.f32 0.0, %v407
    %409 = vdwg.mxu0
    %v411 = vsel %vm260, %v319, 0
    %413 = vmatpush.msra.mxu0 0.0
    %414 = vmatpush.msra.mxu0 0.0
    %415 = vmatpush.msra.mxu0 0.0
    %416 = vmatpush.msra.mxu0 0.0
    %417 = vmatpush.msra.mxu0 0.0
    %418 = vmatpush.msra.mxu0 0.0
    %419 = vmatpush.msra.mxu0 0.0
    %420 = vmatpush.msra.mxu0 0.0
    %421 = vmatpush.msra.mxu0 0.0
    %422 = vmatpush.msra.mxu0 0.0
    %423 = vmatpush.msra.mxu0 0.0
    %424 = vmatpush.msra.mxu0 0.0
    %425 = vmatpush.msra.mxu0 0.0
    %426 = vmatpush.msra.mxu0 0.0
    %427 = vmatpush.msra.mxu0 0.0
    %428 = vmatpush.msra.mxu0 %v256
    %429 = vmatmul.f32.gmra.mxu0 %v411
    %v430 = vpop.f32.mrf.mxu0
    %v431 = vadd.f32 %v408, %v430
    %432 = vdwg.mxu0
    %433 = vrot.lane.b32.xlu0 %v254, 112
    %v434 = vpop.permute.xlu0 %433
    %435 = vrot.lane.b32.xlu0 %v216, 112
    %v436 = vpop.permute.xlu0 %435
    %v437 = vsel %vm260, %v434, 0
    %v439 = vsel %vm260, %v436, 0
    %441 = vmatpush.xpose.msra.mxu0 0.0
    %442 = vmatpush.xpose.msra.mxu0 0.0
    %443 = vmatpush.xpose.msra.mxu0 0.0
    %444 = vmatpush.xpose.msra.mxu0 0.0
    %445 = vmatpush.xpose.msra.mxu0 0.0
    %446 = vmatpush.xpose.msra.mxu0 0.0
    %447 = vmatpush.xpose.msra.mxu0 0.0
    %448 = vmatpush.xpose.msra.mxu0 0.0
    %449 = vmatpush.xpose.msra.mxu0 0.0
    %450 = vmatpush.xpose.msra.mxu0 0.0
    %451 = vmatpush.xpose.msra.mxu0 0.0
    %452 = vmatpush.xpose.msra.mxu0 0.0
    %453 = vmatpush.xpose.msra.mxu0 0.0
    %454 = vmatpush.xpose.msra.mxu0 0.0
    %455 = vmatpush.xpose.msra.mxu0 0.0
    %456 = vmatpush.xpose.msra.mxu0 %v439
    %457 = vmatmul.f32.gmra.mxu0 %v437
    %v458 = vpop.f32.mrf.mxu0
    %v459 = vadd.f32 0.0, %v458
    %460 = vdwg.mxu0
    %v461 = vsel %vm260, %v459, -inf
    %462 = vmax.xlane.f32.xlu0 %v461
    %v463 = vpop.xlane.xlu0 %462
    %v464 = vsub.f32 %v459, %v463
    %v465 = vmul.f32 %v464, 1.442695
    %v466 = vpow.pop %v465
    %v467 = vsel %vm260, %v466, 0.0
    %468 = vadd.xlane.f32.xlu0 %v467
    %v469 = vpop.xlane.xlu0 %468
    %v470 = vrcp.pop %v469
    %v471 = vmul.f32 %v466, %v470
    %472 = vrot.lane.b32.xlu0 %v250, 112
    %v473 = vpop.permute.xlu0 %472
    %v476 = vsel %vm260, %v471, 0
    %478 = vmatpush.msra.mxu0 0.0
    %479 = vmatpush.msra.mxu0 0.0
    %480 = vmatpush.msra.mxu0 0.0
    %481 = vmatpush.msra.mxu0 0.0
    %482 = vmatpush.msra.mxu0 0.0
    %483 = vmatpush.msra.mxu0 0.0
    %484 = vmatpush.msra.mxu0 0.0
    %485 = vmatpush.msra.mxu0 0.0
    %486 = vmatpush.msra.mxu0 0.0
    %487 = vmatpush.msra.mxu0 0.0
    %488 = vmatpush.msra.mxu0 0.0
    %489 = vmatpush.msra.mxu0 0.0
    %490 = vmatpush.msra.mxu0 0.0
    %491 = vmatpush.msra.mxu0 0.0
    %492 = vmatpush.msra.mxu0 0.0
    %493 = vmatpush.msra.mxu0 %v473
    %494 = vmatmul.f32.gmra.mxu0 %v476
    %v495 = vpop.f32.mrf.mxu0
    %v496 = vadd.f32 0.0, %v495
    %497 = vdwg.mxu0
    %v499 = vsel %vm260, %v496, 0
    %501 = vmatpush.msra.mxu0 0.0
    %502 = vmatpush.msra.mxu0 0.0
    %503 = vmatpush.msra.mxu0 0.0
    %504 = vmatpush.msra.mxu0 0.0
    %505 = vmatpush.msra.mxu0 0.0
    %506 = vmatpush.msra.mxu0 0.0
    %507 = vmatpush.msra.mxu0 0.0
    %508 = vmatpush.msra.mxu0 0.0
    %509 = vmatpush.msra.mxu0 0.0
    %510 = vmatpush.msra.mxu0 0.0
    %511 = vmatpush.msra.mxu0 0.0
    %512 = vmatpush.msra.mxu0 0.0
    %513 = vmatpush.msra.mxu0 0.0
    %514 = vmatpush.msra.mxu0 0.0
    %515 = vmatpush.msra.mxu0 0.0
    %516 = vmatpush.msra.mxu0 %v258
    %517 = vmatmul.f32.gmra.mxu0 %v499
    %v518 = vpop.f32.mrf.mxu0
    %v519 = vadd.f32 0.0, %v518
    %520 = vdwg.mxu0
    %v521 = vadd.f32 %v431, %v519
    %522 = vrot.lane.b32.xlu0 %v254, 104
    %v523 = vpop.permute.xlu0 %522
    %524 = vrot.lane.b32.xlu0 %v216, 104
    %v525 = vpop.permute.xlu0 %524
    %v526 = vsel %vm260, %v523, 0
    %v528 = vsel %vm260, %v525, 0
    %530 = vmatpush.xpose.msra.mxu0 0.0
    %531 = vmatpush.xpose.msra.mxu0 0.0
    %532 = vmatpush.xpose.msra.mxu0 0.0
    %533 = vmatpush.xpose.msra.mxu0 0.0
    %534 = vmatpush.xpose.msra.mxu0 0.0
    %535 = vmatpush.xpose.msra.mxu0 0.0
    %536 = vmatpush.xpose.msra.mxu0 0.0
    %537 = vmatpush.xpose.msra.mxu0 0.0
    %538 = vmatpush.xpose.msra.mxu0 0.0
    %539 = vmatpush.xpose.msra.mxu0 0.0
    %540 = vmatpush.xpose.msra.mxu0 0.0
    %541 = vmatpush.xpose.msra.mxu0 0.0
    %542 = vmatpush.xpose.msra.mxu0 0.0
    %543 = vmatpush.xpose.msra.mxu0 0.0
    %544 = vmatpush.xpose.msra.mxu0 0.0
    %545 = vmatpush.xpose.msra.mxu0 %v528
    %546 = vmatmul.f32.gmra.mxu0 %v526
    %v547 = vpop.f32.mrf.mxu0
    %v548 = vadd.f32 0.0, %v547
    %549 = vdwg.mxu0
    %v550 = vsel %vm260, %v548, -inf
    %551 = vmax.xlane.f32.xlu0 %v550
    %v552 = vpop.xlane.xlu0 %551
    %v553 = vsub.f32 %v548, %v552
    %v554 = vmul.f32 %v553, 1.442695
    %v555 = vpow.pop %v554
    %v556 = vsel %vm260, %v555, 0.0
    %557 = vadd.xlane.f32.xlu0 %v556
    %v558 = vpop.xlane.xlu0 %557
    %v559 = vrcp.pop %v558
    %v560 = vmul.f32 %v555, %v559
    %561 = vrot.lane.b32.xlu0 %v250, 104
    %v562 = vpop.permute.xlu0 %561
    %v565 = vsel %vm260, %v560, 0
    %567 = vmatpush.msra.mxu0 0.0
    %568 = vmatpush.msra.mxu0 0.0
    %569 = vmatpush.msra.mxu0 0.0
    %570 = vmatpush.msra.mxu0 0.0
    %571 = vmatpush.msra.mxu0 0.0
    %572 = vmatpush.msra.mxu0 0.0
    %573 = vmatpush.msra.mxu0 0.0
    %574 = vmatpush.msra.mxu0 0.0
    %575 = vmatpush.msra.mxu0 0.0
    %576 = vmatpush.msra.mxu0 0.0
    %577 = vmatpush.msra.mxu0 0.0
    %578 = vmatpush.msra.mxu0 0.0
    %579 = vmatpush.msra.mxu0 0.0
    %580 = vmatpush.msra.mxu0 0.0
    %581 = vmatpush.msra.mxu0 0.0
    %582 = vmatpush.msra.mxu0 %v562
    %583 = vmatmul.f32.gmra.mxu0 %v565
    %v584 = vpop.f32.mrf.mxu0
    %v585 = vadd.f32 0.0, %v584
    %586 = vdwg.mxu0
    %v588 = vsel %vm260, %v585, 0
    %590 = vmatpush.msra.mxu0 0.0
    %591 = vmatpush.msra.mxu0 0.0
    %592 = vmatpush.msra.mxu0 0.0
    %593 = vmatpush.msra.mxu0 0.0
    %594 = vmatpush.msra.mxu0 0.0
    %595 = vmatpush.msra.mxu0 0.0
    %596 = vmatpush.msra.mxu0 0.0
    %597 = vmatpush.msra.mxu0 0.0
    %598 = vmatpush.msra.mxu0 0.0
    %599 = vmatpush.msra.mxu0 0.0
    %600 = vmatpush.msra.mxu0 0.0
    %601 = vmatpush.msra.mxu0 0.0
    %602 = vmatpush.msra.mxu0 0.0
    %603 = vmatpush.msra.mxu0 0.0
    %604 = vmatpush.msra.mxu0 0.0
    %605 = vmatpush.msra.mxu0 %v259
    %606 = vmatmul.f32.gmra.mxu0 %v588
    %v607 = vpop.f32.mrf.mxu0
    %v608 = vadd.f32 0.0, %v607
    %609 = vdwg.mxu0
    %v610 = vadd.f32 %v521, %v608
    %v612 = vsel %vm260, %v255, 0
    %v615 = vsel %vm260, %v218, 0
    %617 = vmatpush.xpose.msra.mxu0 0.0
    %618 = vmatpush.xpose.msra.mxu0 0.0
    %619 = vmatpush.xpose.msra.mxu0 0.0
    %620 = vmatpush.xpose.msra.mxu0 0.0
    %621 = vmatpush.xpose.msra.mxu0 0.0
    %622 = vmatpush.xpose.msra.mxu0 0.0
    %623 = vmatpush.xpose.msra.mxu0 0.0
    %624 = vmatpush.xpose.msra.mxu0 0.0
    %625 = vmatpush.xpose.msra.mxu0 0.0
    %626 = vmatpush.xpose.msra.mxu0 0.0
    %627 = vmatpush.xpose.msra.mxu0 0.0
    %628 = vmatpush.xpose.msra.mxu0 0.0
    %629 = vmatpush.xpose.msra.mxu0 0.0
    %630 = vmatpush.xpose.msra.mxu0 0.0
    %631 = vmatpush.xpose.msra.mxu0 0.0
    %632 = vmatpush.xpose.msra.mxu0 %v615
    %633 = vmatmul.f32.gmra.mxu0 %v612
    %v634 = vpop.f32.mrf.mxu0
    %v635 = vadd.f32 0.0, %v634
    %636 = vdwg.mxu0
    %v637 = vsel %vm260, %v635, -inf
    %638 = vmax.xlane.f32.xlu0 %v637
    %v639 = vpop.xlane.xlu0 %638
    %v640 = vsub.f32 %v635, %v639
    %v641 = vmul.f32 %v640, 1.442695
    %v642 = vpow.pop %v641
    %v643 = vsel %vm260, %v642, 0.0
    %644 = vadd.xlane.f32.xlu0 %v643
    %v645 = vpop.xlane.xlu0 %644
    %v646 = vrcp.pop %v645
    %v647 = vmul.f32 %v642, %v646
    %v649 = vsel %vm260, %v647, 0
    %651 = vmatpush.msra.mxu0 0.0
    %652 = vmatpush.msra.mxu0 0.0
    %653 = vmatpush.msra.mxu0 0.0
    %654 = vmatpush.msra.mxu0 0.0
    %655 = vmatpush.msra.mxu0 0.0
    %656 = vmatpush.msra.mxu0 0.0
    %657 = vmatpush.msra.mxu0 0.0
    %658 = vmatpush.msra.mxu0 0.0
    %659 = vmatpush.msra.mxu0 0.0
    %660 = vmatpush.msra.mxu0 0.0
    %661 = vmatpush.msra.mxu0 0.0
    %662 = vmatpush.msra.mxu0 0.0
    %663 = vmatpush.msra.mxu0 0.0
    %664 = vmatpush.msra.mxu0 0.0
    %665 = vmatpush.msra.mxu0 0.0
    %666 = vmatpush.msra.mxu0 %v252
    %667 = vmatmul.f32.gmra.mxu0 %v649
    %v668 = vpop.f32.mrf.mxu0
    %v669 = vadd.f32 0.0, %v668
    %670 = vdwg.mxu0
    %671 = vrot.lane.b32.xlu0 %v255, 120
    %v672 = vpop.permute.xlu0 %671
    %673 = vrot.lane.b32.xlu0 %v218, 120
    %v674 = vpop.permute.xlu0 %673
    %v675 = vsel %vm260, %v672, 0
    %v677 = vsel %vm260, %v674, 0
    %679 = vmatpush.xpose.msra.mxu0 0.0
    %680 = vmatpush.xpose.msra.mxu0 0.0
    %681 = vmatpush.xpose.msra.mxu0 0.0
    %682 = vmatpush.xpose.msra.mxu0 0.0
    %683 = vmatpush.xpose.msra.mxu0 0.0
    %684 = vmatpush.xpose.msra.mxu0 0.0
    %685 = vmatpush.xpose.msra.mxu0 0.0
    %686 = vmatpush.xpose.msra.mxu0 0.0
    %687 = vmatpush.xpose.msra.mxu0 0.0
    %688 = vmatpush.xpose.msra.mxu0 0.0
    %689 = vmatpush.xpose.msra.mxu0 0.0
    %690 = vmatpush.xpose.msra.mxu0 0.0
    %691 = vmatpush.xpose.msra.mxu0 0.0
    %692 = vmatpush.xpose.msra.mxu0 0.0
    %693 = vmatpush.xpose.msra.mxu0 0.0
    %694 = vmatpush.xpose.msra.mxu0 %v677
    %695 = vmatmul.f32.gmra.mxu0 %v675
    %v696 = vpop.f32.mrf.mxu0
    %v697 = vadd.f32 0.0, %v696
    %698 = vdwg.mxu0
    %v699 = vsel %vm260, %v697, -inf
    %700 = vmax.xlane.f32.xlu0 %v699
    %v701 = vpop.xlane.xlu0 %700
    %v702 = vsub.f32 %v697, %v701
    %v703 = vmul.f32 %v702, 1.442695
    %v704 = vpow.pop %v703
    %v705 = vsel %vm260, %v704, 0.0
    %706 = vadd.xlane.f32.xlu0 %v705
    %v707 = vpop.xlane.xlu0 %706
    %v708 = vrcp.pop %v707
    %v709 = vmul.f32 %v704, %v708
    %711 = vrot.lane.b32.xlu0 %v252, 120
    %v712 = vpop.permute.xlu0 %711
    %v715 = vsel %vm260, %v709, 0
    %717 = vmatpush.msra.mxu0 0.0
    %718 = vmatpush.msra.mxu0 0.0
    %719 = vmatpush.msra.mxu0 0.0
    %720 = vmatpush.msra.mxu0 0.0
    %721 = vmatpush.msra.mxu0 0.0
    %722 = vmatpush.msra.mxu0 0.0
    %723 = vmatpush.msra.mxu0 0.0
    %724 = vmatpush.msra.mxu0 0.0
    %725 = vmatpush.msra.mxu0 0.0
    %726 = vmatpush.msra.mxu0 0.0
    %727 = vmatpush.msra.mxu0 0.0
    %728 = vmatpush.msra.mxu0 0.0
    %729 = vmatpush.msra.mxu0 0.0
    %730 = vmatpush.msra.mxu0 0.0
    %731 = vmatpush.msra.mxu0 0.0
    %732 = vmatpush.msra.mxu0 %v712
    %733 = vmatmul.f32.gmra.mxu0 %v715
    %v734 = vpop.f32.mrf.mxu0
    %v735 = vadd.f32 0.0, %v734
    %736 = vdwg.mxu0
    %v738 = vsel %vm260, %v735, 0
    %740 = vmatpush.msra.mxu0 0.0
    %741 = vmatpush.msra.mxu0 0.0
    %742 = vmatpush.msra.mxu0 0.0
    %743 = vmatpush.msra.mxu0 0.0
    %744 = vmatpush.msra.mxu0 0.0
    %745 = vmatpush.msra.mxu0 0.0
    %746 = vmatpush.msra.mxu0 0.0
    %747 = vmatpush.msra.mxu0 0.0
    %748 = vmatpush.msra.mxu0 0.0
    %749 = vmatpush.msra.mxu0 0.0
    %750 = vmatpush.msra.mxu0 0.0
    %751 = vmatpush.msra.mxu0 0.0
    %752 = vmatpush.msra.mxu0 0.0
    %753 = vmatpush.msra.mxu0 0.0
    %754 = vmatpush.msra.mxu0 0.0
    %755 = vmatpush.msra.mxu0 %v257
    %756 = vmatmul.f32.gmra.mxu0 %v738
    %v757 = vpop.f32.mrf.mxu0
    %v758 = vadd.f32 0.0, %v757
    %759 = vdwg.mxu0
    %v761 = vsel %vm260, %v669, 0
    %763 = vmatpush.msra.mxu0 0.0
    %764 = vmatpush.msra.mxu0 0.0
    %765 = vmatpush.msra.mxu0 0.0
    %766 = vmatpush.msra.mxu0 0.0
    %767 = vmatpush.msra.mxu0 0.0
    %768 = vmatpush.msra.mxu0 0.0
    %769 = vmatpush.msra.mxu0 0.0
    %770 = vmatpush.msra.mxu0 0.0
    %771 = vmatpush.msra.mxu0 0.0
    %772 = vmatpush.msra.mxu0 0.0
    %773 = vmatpush.msra.mxu0 0.0
    %774 = vmatpush.msra.mxu0 0.0
    %775 = vmatpush.msra.mxu0 0.0
    %776 = vmatpush.msra.mxu0 0.0
    %777 = vmatpush.msra.mxu0 0.0
    %778 = vmatpush.msra.mxu0 %v256
    %779 = vmatmul.f32.gmra.mxu0 %v761
    %v780 = vpop.f32.mrf.mxu0
    %v781 = vadd.f32 %v758, %v780
    %782 = vdwg.mxu0
    %783 = vrot.lane.b32.xlu0 %v255, 112
    %v784 = vpop.permute.xlu0 %783
    %785 = vrot.lane.b32.xlu0 %v218, 112
    %v786 = vpop.permute.xlu0 %785
    %v787 = vsel %vm260, %v784, 0
    %v789 = vsel %vm260, %v786, 0
    %791 = vmatpush.xpose.msra.mxu0 0.0
    %792 = vmatpush.xpose.msra.mxu0 0.0
    %793 = vmatpush.xpose.msra.mxu0 0.0
    %794 = vmatpush.xpose.msra.mxu0 0.0
    %795 = vmatpush.xpose.msra.mxu0 0.0
    %796 = vmatpush.xpose.msra.mxu0 0.0
    %797 = vmatpush.xpose.msra.mxu0 0.0
    %798 = vmatpush.xpose.msra.mxu0 0.0
    %799 = vmatpush.xpose.msra.mxu0 0.0
    %800 = vmatpush.xpose.msra.mxu0 0.0
    %801 = vmatpush.xpose.msra.mxu0 0.0
    %802 = vmatpush.xpose.msra.mxu0 0.0
    %803 = vmatpush.xpose.msra.mxu0 0.0
    %804 = vmatpush.xpose.msra.mxu0 0.0
    %805 = vmatpush.xpose.msra.mxu0 0.0
    %806 = vmatpush.xpose.msra.mxu0 %v789
    %807 = vmatmul.f32.gmra.mxu0 %v787
    %v808 = vpop.f32.mrf.mxu0
    %v809 = vadd.f32 0.0, %v808
    %810 = vdwg.mxu0
    %v811 = vsel %vm260, %v809, -inf
    %812 = vmax.xlane.f32.xlu0 %v811
    %v813 = vpop.xlane.xlu0 %812
    %v814 = vsub.f32 %v809, %v813
    %v815 = vmul.f32 %v814, 1.442695
    %v816 = vpow.pop %v815
    %v817 = vsel %vm260, %v816, 0.0
    %818 = vadd.xlane.f32.xlu0 %v817
    %v819 = vpop.xlane.xlu0 %818
    %v820 = vrcp.pop %v819
    %v821 = vmul.f32 %v816, %v820
    %822 = vrot.lane.b32.xlu0 %v252, 112
    %v823 = vpop.permute.xlu0 %822
    %v826 = vsel %vm260, %v821, 0
    %828 = vmatpush.msra.mxu0 0.0
    %829 = vmatpush.msra.mxu0 0.0
    %830 = vmatpush.msra.mxu0 0.0
    %831 = vmatpush.msra.mxu0 0.0
    %832 = vmatpush.msra.mxu0 0.0
    %833 = vmatpush.msra.mxu0 0.0
    %834 = vmatpush.msra.mxu0 0.0
    %835 = vmatpush.msra.mxu0 0.0
    %836 = vmatpush.msra.mxu0 0.0
    %837 = vmatpush.msra.mxu0 0.0
    %838 = vmatpush.msra.mxu0 0.0
    %839 = vmatpush.msra.mxu0 0.0
    %840 = vmatpush.msra.mxu0 0.0
    %841 = vmatpush.msra.mxu0 0.0
    %842 = vmatpush.msra.mxu0 0.0
    %843 = vmatpush.msra.mxu0 %v823
    %844 = vmatmul.f32.gmra.mxu0 %v826
    %v845 = vpop.f32.mrf.mxu0
    %v846 = vadd.f32 0.0, %v845
    %847 = vdwg.mxu0
    %v849 = vsel %vm260, %v846, 0
    %851 = vmatpush.msra.mxu0 0.0
    %852 = vmatpush.msra.mxu0 0.0
    %853 = vmatpush.msra.mxu0 0.0
    %854 = vmatpush.msra.mxu0 0.0
    %855 = vmatpush.msra.mxu0 0.0
    %856 = vmatpush.msra.mxu0 0.0
    %857 = vmatpush.msra.mxu0 0.0
    %858 = vmatpush.msra.mxu0 0.0
    %859 = vmatpush.msra.mxu0 0.0
    %860 = vmatpush.msra.mxu0 0.0
    %861 = vmatpush.msra.mxu0 0.0
    %862 = vmatpush.msra.mxu0 0.0
    %863 = vmatpush.msra.mxu0 0.0
    %864 = vmatpush.msra.mxu0 0.0
    %865 = vmatpush.msra.mxu0 0.0
    %866 = vmatpush.msra.mxu0 %v258
    %867 = vmatmul.f32.gmra.mxu0 %v849
    %v868 = vpop.f32.mrf.mxu0
    %v869 = vadd.f32 0.0, %v868
    %870 = vdwg.mxu0
    %v871 = vadd.f32 %v781, %v869
    %872 = vrot.lane.b32.xlu0 %v255, 104
    %v873 = vpop.permute.xlu0 %872
    %874 = vrot.lane.b32.xlu0 %v218, 104
    %v875 = vpop.permute.xlu0 %874
    %v876 = vsel %vm260, %v873, 0
    %v878 = vsel %vm260, %v875, 0
    %880 = vmatpush.xpose.msra.mxu0 0.0
    %881 = vmatpush.xpose.msra.mxu0 0.0
    %882 = vmatpush.xpose.msra.mxu0 0.0
    %883 = vmatpush.xpose.msra.mxu0 0.0
    %884 = vmatpush.xpose.msra.mxu0 0.0
    %885 = vmatpush.xpose.msra.mxu0 0.0
    %886 = vmatpush.xpose.msra.mxu0 0.0
    %887 = vmatpush.xpose.msra.mxu0 0.0
    %888 = vmatpush.xpose.msra.mxu0 0.0
    %889 = vmatpush.xpose.msra.mxu0 0.0
    %890 = vmatpush.xpose.msra.mxu0 0.0
    %891 = vmatpush.xpose.msra.mxu0 0.0
    %892 = vmatpush.xpose.msra.mxu0 0.0
    %893 = vmatpush.xpose.msra.mxu0 0.0
    %894 = vmatpush.xpose.msra.mxu0 0.0
    %895 = vmatpush.xpose.msra.mxu0 %v878
    %896 = vmatmul.f32.gmra.mxu0 %v876
    %v897 = vpop.f32.mrf.mxu0
    %v898 = vadd.f32 0.0, %v897
    %899 = vdwg.mxu0
    %v900 = vsel %vm260, %v898, -inf
    %901 = vmax.xlane.f32.xlu0 %v900
    %v902 = vpop.xlane.xlu0 %901
    %v903 = vsub.f32 %v898, %v902
    %v904 = vmul.f32 %v903, 1.442695
    %v905 = vpow.pop %v904
    %v906 = vsel %vm260, %v905, 0.0
    %907 = vadd.xlane.f32.xlu0 %v906
    %v908 = vpop.xlane.xlu0 %907
    %v909 = vrcp.pop %v908
    %v910 = vmul.f32 %v905, %v909
    %911 = vrot.lane.b32.xlu0 %v252, 104
    %v912 = vpop.permute.xlu0 %911
    %v915 = vsel %vm260, %v910, 0
    %917 = vmatpush.msra.mxu0 0.0
    %918 = vmatpush.msra.mxu0 0.0
    %919 = vmatpush.msra.mxu0 0.0
    %920 = vmatpush.msra.mxu0 0.0
    %921 = vmatpush.msra.mxu0 0.0
    %922 = vmatpush.msra.mxu0 0.0
    %923 = vmatpush.msra.mxu0 0.0
    %924 = vmatpush.msra.mxu0 0.0
    %925 = vmatpush.msra.mxu0 0.0
    %926 = vmatpush.msra.mxu0 0.0
    %927 = vmatpush.msra.mxu0 0.0
    %928 = vmatpush.msra.mxu0 0.0
    %929 = vmatpush.msra.mxu0 0.0
    %930 = vmatpush.msra.mxu0 0.0
    %931 = vmatpush.msra.mxu0 0.0
    %932 = vmatpush.msra.mxu0 %v912
    %933 = vmatmul.f32.gmra.mxu0 %v915
    %v934 = vpop.f32.mrf.mxu0
    %v935 = vadd.f32 0.0, %v934
    %936 = vdwg.mxu0
    %v938 = vsel %vm260, %v935, 0
    %940 = vmatpush.msra.mxu0 0.0
    %941 = vmatpush.msra.mxu0 0.0
    %942 = vmatpush.msra.mxu0 0.0
    %943 = vmatpush.msra.mxu0 0.0
    %944 = vmatpush.msra.mxu0 0.0
    %945 = vmatpush.msra.mxu0 0.0
    %946 = vmatpush.msra.mxu0 0.0
    %947 = vmatpush.msra.mxu0 0.0
    %948 = vmatpush.msra.mxu0 0.0
    %949 = vmatpush.msra.mxu0 0.0
    %950 = vmatpush.msra.mxu0 0.0
    %951 = vmatpush.msra.mxu0 0.0
    %952 = vmatpush.msra.mxu0 0.0
    %953 = vmatpush.msra.mxu0 0.0
    %954 = vmatpush.msra.mxu0 0.0
    %955 = vmatpush.msra.mxu0 %v259
    %956 = vmatmul.f32.gmra.mxu0 %v938
    %v957 = vpop.f32.mrf.mxu0
    %v958 = vadd.f32 0.0, %v957
    %959 = vdwg.mxu0
    %v960 = vadd.f32 %v871, %v958
    %v961 = vld [vmem:[%s9] sm:$0x1]
    %v963 = vperm.slane %v961, 0
    %v965 = vadd.f32 %v610, %v963
    %v966 = vadd.f32 %v960, %v963
    %v967 = vadd.f32 %v139, %v965
    %v968 = vadd.f32 %v140, %v966
    %v969 = vld [vmem:[%s14] sm:$0x1]
    %v970 = vld [vmem:[%s15] sm:$0x1]
    %v971 = vsel %vm165, %v967, 0.0
    %972 = vadd.xlane.f32.xlu0 %v971
    %v973 = vpop.xlane.xlu0 %972
    %v974 = vsel %vm165, %v968, 0.0
    %975 = vadd.xlane.f32.xlu0 %v974
    %v976 = vpop.xlane.xlu0 %975
    %v977 = vrcp.pop 32.0
    %v978 = vmul.f32 32.0, %v977
    %v979 = vsub.f32 1.0, %v978
    %v980 = vmul.f32 %v977, %v979
    %v981 = vadd.f32 %v977, %v980
    %vm982 = vweird.f32 %v977
    %v983 = vsel %vm982, %v977, %v981
    %v984 = vmul.f32 %v973, %v983
    %v985 = vmul.f32 %v976, %v983
    %v986 = vmul.f32 %v967, %v967
    %v987 = vmul.f32 %v968, %v968
    %v988 = vsel %vm165, %v986, 0.0
    %989 = vadd.xlane.f32.xlu0 %v988
    %v990 = vpop.xlane.xlu0 %989
    %v991 = vsel %vm165, %v987, 0.0
    %992 = vadd.xlane.f32.xlu0 %v991
    %v993 = vpop.xlane.xlu0 %992
    %v994 = vmul.f32 %v990, %v983
    %v995 = vmul.f32 %v993, %v983
    %v996 = vmul.f32 %v984, %v984
    %v997 = vmul.f32 %v985, %v985
    %v998 = vsub.f32 %v994, %v996
    %v999 = vsub.f32 %v995, %v997
    %v1000 = vsub.f32 %v967, %v984
    %v1001 = vsub.f32 %v968, %v985
    %v1002 = vadd.f32 %v998, 1e-05
    %v1003 = vadd.f32 %v999, 1e-05
    %v1004 = vrsqrt.pop %v1002
    %v1005 = vmul.f32 %v1004, %v1002
    %v1006 = vmul.f32 %v1005, %v1004
    %v1007 = vmul.f32 0.5, %v1006
    %v1008 = vsub.f32 1.5, %v1007
    %v1009 = vmul.f32 %v1004, %v1008
    %vm1010 = vweird.f32 %v1002
    %vm1011 = vweird.f32 %v1004
    %vm1012 = vmor %vm1010, %vm1011
    %v1013 = vsel %vm1012, %v1004, %v1009
    %v1014 = vrsqrt.pop %v1003
    %v1015 = vmul.f32 %v1014, %v1003
    %v1016 = vmul.f32 %v1015, %v1014
    %v1017 = vmul.f32 0.5, %v1016
    %v1018 = vsub.f32 1.5, %v1017
    %v1019 = vmul.f32 %v1014, %v1018
    %vm1020 = vweird.f32 %v1003
    %vm1021 = vweird.f32 %v1014
    %vm1022 = vmor %vm1020, %vm1021
    %v1023 = vsel %vm1022, %v1014, %v1019
    %v1024 = vmul.f32 %v1000, %v1013
    %v1025 = vmul.f32 %v1001, %v1023
    %v1027 = vperm.slane %v969, 0
    %v1029 = vmul.f32 %v1024, %v1027
    %v1030 = vmul.f32 %v1025, %v1027
    %v1032 = vperm.slane %v970, 0
    %v1034 = vadd.f32 %v1029, %v1032
    %v1035 = vadd.f32 %v1030, %v1032
    %v1036 = vpack.c.bf16 %v966, %v965
    %v1037 = vld [vmem:[#allocation10] sm:$0xf]
    %v1038 = vld [vmem:[#allocation10 + $0x4] sm:$0xf]
    %v1039 = vld [vmem:[#allocation10 + $0x8] sm:$0xf]
    %v1040 = vld [vmem:[#allocation10 + $0xc] sm:$0xf]
    %v1041 = vld [vmem:[%s11] sm:$0x1]
    %v1043 = vperm.slane %v1041, 0
    %v1049 = vunpack.c.l.b16 %v1037
    %v1050 = vunpack.c.l.b16 %v1038
    %v1051 = vunpack.c.l.b16 %v1039
    %v1052 = vunpack.c.l.b16 %v1040
    %v1053 = vpack.c.b16 %v1050, %v1049
    %v1054 = vpack.c.b16 %v1052, %v1051
    %v1058 = vsel %vm165, %v1036, 0
    %1060 = vmatpush.bf16.msra.mxu0 0
    %1061 = vmatpush.bf16.msra.mxu0 0
    %1062 = vmatpush.bf16.msra.mxu0 0
    %1063 = vmatpush.bf16.msra.mxu0 0
    %1064 = vmatpush.bf16.msra.mxu0 0
    %1065 = vmatpush.bf16.msra.mxu0 0
    %1066 = vmatpush.bf16.msra.mxu0 %v1054
    %1067 = vmatpush.bf16.msra.mxu0 %v1053
    %1068 = vmatmul.bf16.gmra.mxu0 %v1058
    %v1069 = vpop.f32.mrf.mxu0
    %v1070 = vadd.f32 %v1043, %v1069
    %v1071 = vpop.f32.mrf.mxu0
    %v1072 = vadd.f32 %v1043, %v1071
    %1073 = vdwg.mxu0
    %v1074 = vmax.f32 %v1070, 0.0
    %v1075 = vmax.f32 %v1072, 0.0
    %v1076 = vpack.c.bf16 %v1075, %v1074
    %v1077 = vld [vmem:[%s12] sm:$0xf]
    %v1078 = vld [vmem:[%s12 + $0x4] sm:$0xf]
    %v1079 = vld [vmem:[%s12 + $0x8] sm:$0xf]
    %v1080 = vld [vmem:[%s12 + $0xc] sm:$0xf]
    %v1081 = vld [vmem:[%s12 + $0x10] sm:$0xf]
    %v1082 = vld [vmem:[%s12 + $0x14] sm:$0xf]
    %v1083 = vld [vmem:[%s12 + $0x18] sm:$0xf]
    %v1084 = vld [vmem:[%s12 + $0x1c] sm:$0xf]
    %v1085 = vld [vmem:[%s13] sm:$0x1]
    %v1087 = vperm.slane %v1085, 0
    %v1097 = vunpack.c.l.b16 %v1077
    %v1098 = vunpack.c.l.b16 %v1078
    %v1099 = vunpack.c.l.b16 %v1079
    %v1100 = vunpack.c.l.b16 %v1080
    %v1101 = vunpack.c.l.b16 %v1081
    %v1102 = vunpack.c.l.b16 %v1082
    %v1103 = vunpack.c.l.b16 %v1083
    %v1104 = vunpack.c.l.b16 %v1084
    %v1105 = vpack.c.b16 %v1098, %v1097
    %v1106 = vpack.c.b16 %v1100, %v1099
    %v1107 = vpack.c.b16 %v1102, %v1101
    %v1108 = vpack.c.b16 %v1104, %v1103
    %vm1113 = vcmask 523264
    %v1115 = vsel %vm1113, %v1076, 0
    %1117 = vmatpush.bf16.msra.mxu0 0
    %1118 = vmatpush.bf16.msra.mxu0 0
    %1119 = vmatpush.bf16.msra.mxu0 0
    %1120 = vmatpush.bf16.msra.mxu0 0
    %1121 = vmatpush.bf16.msra.mxu0 %v1108
    %1122 = vmatpush.bf16.msra.mxu0 %v1107
    %1123 = vmatpush.bf16.msra.mxu0 %v1106
    %1124 = vmatpush.bf16.msra.mxu0 %v1105
    %1125 = vmatmul.bf16.gmra.mxu0 %v1115
    %v1126 = vpop.f32.mrf.mxu0
    %v1127 = vadd.f32 %v1087, %v1126
    %v1128 = vpop.f32.mrf.mxu0
    %v1129 = vadd.f32 %v1087, %v1128
    %1130 = vdwg.mxu0
    %v1131 = vadd.f32 %v1034, %v1127
    %v1132 = vadd.f32 %v1035, %v1129
    %v1133 = vld [vmem:[%s16] sm:$0x1]
    %v1134 = vld [vmem:[%s17] sm:$0x1]
    %v1135 = vsel %vm165, %v1131, 0.0
    %1136 = vadd.xlane.f32.xlu0 %v1135
    %v1137 = vpop.xlane.xlu0 %1136
    %v1138 = vsel %vm165, %v1132, 0.0
    %1139 = vadd.xlane.f32.xlu0 %v1138
    %v1140 = vpop.xlane.xlu0 %1139
    %v1141 = vmul.f32 %v1137, %v983
    %v1142 = vmul.f32 %v1140, %v983
    %v1143 = vmul.f32 %v1131, %v1131
    %v1144 = vmul.f32 %v1132, %v1132
    %v1145 = vsel %vm165, %v1143, 0.0
    %1146 = vadd.xlane.f32.xlu0 %v1145
    %v1147 = vpop.xlane.xlu0 %1146
    %v1148 = vsel %vm165, %v1144, 0.0
    %1149 = vadd.xlane.f32.xlu0 %v1148
    %v1150 = vpop.xlane.xlu0 %1149
    %v1151 = vmul.f32 %v1147, %v983
    %v1152 = vmul.f32 %v1150, %v983
    %v1153 = vmul.f32 %v1141, %v1141
    %v1154 = vmul.f32 %v1142, %v1142
    %v1155 = vsub.f32 %v1151, %v1153
    %v1156 = vsub.f32 %v1152, %v1154
    %v1157 = vsub.f32 %v1131, %v1141
    %v1158 = vsub.f32 %v1132, %v1142
    %v1159 = vadd.f32 %v1155, 1e-05
    %v1160 = vadd.f32 %v1156, 1e-05
    %v1161 = vrsqrt.pop %v1159
    %v1162 = vmul.f32 %v1161, %v1159
    %v1163 = vmul.f32 %v1162, %v1161
    %v1164 = vmul.f32 0.5, %v1163
    %v1165 = vsub.f32 1.5, %v1164
    %v1166 = vmul.f32 %v1161, %v1165
    %vm1167 = vweird.f32 %v1159
    %vm1168 = vweird.f32 %v1161
    %vm1169 = vmor %vm1167, %vm1168
    %v1170 = vsel %vm1169, %v1161, %v1166
    %v1171 = vrsqrt.pop %v1160
    %v1172 = vmul.f32 %v1171, %v1160
    %v1173 = vmul.f32 %v1172, %v1171
    %v1174 = vmul.f32 0.5, %v1173
    %v1175 = vsub.f32 1.5, %v1174
    %v1176 = vmul.f32 %v1171, %v1175
    %vm1177 = vweird.f32 %v1160
    %vm1178 = vweird.f32 %v1171
    %vm1179 = vmor %vm1177, %vm1178
    %v1180 = vsel %vm1179, %v1171, %v1176
    %v1181 = vmul.f32 %v1157, %v1170
    %v1182 = vmul.f32 %v1158, %v1180
    %v1184 = vperm.slane %v1133, 0
    %v1186 = vmul.f32 %v1181, %v1184
    %v1187 = vmul.f32 %v1182, %v1184
    %v1189 = vperm.slane %v1134, 0
    %v1191 = vadd.f32 %v1186, %v1189
    %v1192 = vadd.f32 %v1187, %v1189
    %1193 = vst.msk [vmem:[#allocation11] sm:$0xff] %vm165, %v1191
    %1194 = vst.msk [vmem:[#allocation11 + $0x8] sm:$0xff] %vm165, %v1192
    // Predicated region
    $region94: #{tpu_custom_call.1} parent=1 // pred_check
      _
    $region95: #{tpu_custom_call.1} parent=1 // pred_check_branch
      %1196 = sbr.rel (0) target = $region97
    $region96: #{tpu_custom_call.1} parent=1 // pred_region
      %1198 = vsyncadd [#allocation4], 0
      %s1199 = sshll.u32 [#allocation11], 4
      %s1200 = int_to_ptr.vmem [resolvable:$true] %s1199
      %s1201 = sshll.u32 %s18, 4
      %s1202 = int_to_ptr.hbm [resolvable:$true] %s1201
      %1207 = dma.vmem_to_hbm [thread:$0]  %s1200, 256, %s1202, [#allocation4], 128, 128, 8
    $region97: #{tpu_custom_call.1} parent=1 // pred_fallthru
      _
    // Predicated region
    $region98: #{tpu_custom_call.1} parent=1 // pred_check
      _
    $region99: #{tpu_custom_call.1} parent=1 // pred_check_branch
      %1209 = sbr.rel (0) target = $region101
    $region100: #{tpu_custom_call.1} parent=1 // pred_region
      %1211 = dma.done [#allocation4], 256
    $region101: #{tpu_custom_call.1} parent=1 // pred_fallthru
      _
    %1212 = vsyncpa [#allocation3], 1
    %1213 = vsyncpa [#allocation6], 1
    %1214 = vsyncpa [#allocation9], 1
    %1215 = vsyncpa [#allocation4], 1

</llo_original>
